<compile_context>
chip_gen: v7x
topology: tpu7x:2x2x1
jax: 0.10.0
libtpu: 0.0.40
codegen_flags: <defaults>
</compile_context>

<pallas_src>
import functools

import jax
import jax.numpy as jnp
from jax import lax
from jax.experimental import pallas as pl

# ----------------------- small synthetic BERT config -----------------------
# TODO(synk): real bert-base-chinese (H=768, V=21128) + pretrained weights /
# tokenizer cannot be loaded in-script; a shrunken synthetic config is used.
VOCAB = 128
HIDDEN = 32
N_LAYERS = 2
N_HEADS = 2
HEAD_DIM = HIDDEN // N_HEADS
FFN = 64
MAX_POS = 64
LN_EPS = 1e-12                      # BERT layernorm epsilon
ATTN_SCALE = 1.0 / (HEAD_DIM ** 0.5)

# ---- layout of the packed f32 "vector slab" (one 128-lane row per vector) ----
VEC_WIDTH = 128
_VR_EMB_G, _VR_EMB_B = 0, 1
_VR_L0 = 2
_VR_PER_LAYER = 8
(_VR_BQKV, _VR_BO, _VR_LN1G, _VR_LN1B,
 _VR_B1, _VR_B2, _VR_LN2G, _VR_LN2B) = range(_VR_PER_LAYER)
_VR_BCLS = _VR_L0 + N_LAYERS * _VR_PER_LAYER
VEC_ROWS = _VR_BCLS + 1


# ------------------------------ kernel helpers ------------------------------
def _layernorm(x, g, b):
    mu = jnp.mean(x, axis=-1, keepdims=True)
    xc = x - mu
    var = jnp.mean(xc * xc, axis=-1, keepdims=True)
    return xc * lax.rsqrt(var + LN_EPS) * g + b


def _gelu(y):
    # TODO(synk): HF BERT uses erf-GELU; tanh approximation used here (~1e-3 drift).
    return 0.5 * y * (1.0 + jnp.tanh(0.7978845608028654
                                     * (y + 0.044715 * y * y * y)))


def _mm(a, w_bf16):
    # bf16 x bf16 MXU operands, f32 accumulation; 'a' is cast exactly once here.
    return jnp.dot(a.astype(jnp.bfloat16), w_bf16,
                   preferred_element_type=jnp.float32)


def _vrow(vec_ref, row, width):
    # one padded vector from the packed slab -> (1, width) f32
    return vec_ref[row:row + 1, :width]


# --------------------------- fused whole-model kernel ---------------------------
def _model_kernel(*refs, batch, seq, mode):
    if mode == "loss":
        (emb_ref, wqkv_ref, wo_ref, w1_ref, w2_ref,
         wcls_ref, vec_ref, lbl_ref, out_ref) = refs
    else:
        (emb_ref, wqkv_ref, wo_ref, w1_ref, w2_ref,
         wcls_ref, vec_ref, out_ref) = refs

    bs = batch * seq

    # --- embeddings -> LayerNorm (tokens of all batch rows folded together) ---
    h = _layernorm(emb_ref[...],
                   _vrow(vec_ref, _VR_EMB_G, HIDDEN),
                   _vrow(vec_ref, _VR_EMB_B, HIDDEN))                 # (BS, H) f32

    # --- encoder layers; every intermediate stays on-chip ---
    for l in range(N_LAYERS):
        base = _VR_L0 + l * _VR_PER_LAYER

        # fused Q|K|V projection: one (BS,H) @ (H,3H) matmul
        qkv = _mm(h, wqkv_ref[l]) + _vrow(vec_ref, base + _VR_BQKV, 3 * HIDDEN)
        qkv_bf = qkv.astype(jnp.bfloat16)                             # cast once

        ctx_heads = []
        for hh in range(N_HEADS):                                     # static, 2 heads
            lo = hh * HEAD_DIM
            q_h = qkv_bf[:, lo:lo + HEAD_DIM].reshape(batch, seq, HEAD_DIM)
            k_h = qkv_bf[:, HIDDEN + lo:
                         HIDDEN + lo + HEAD_DIM].reshape(batch, seq, HEAD_DIM)
            v_h = qkv_bf[:, 2 * HIDDEN + lo:
                         2 * HIDDEN + lo + HEAD_DIM].reshape(batch, seq, HEAD_DIM)

            # B-batched scores / context: attention stays per-sequence
            s = jnp.einsum('bqd,bkd->bqk', q_h, k_h,
                           preferred_element_type=jnp.float32) * ATTN_SCALE
            m = jnp.max(s, axis=-1, keepdims=True)
            p = jnp.exp(s - m)
            # EUP reciprocal: removes the serialized vector divide per row
            p = p * pl.reciprocal(jnp.sum(p, axis=-1, keepdims=True), approx=True)
            ctx = jnp.einsum('bqk,bkd->bqd', p.astype(jnp.bfloat16), v_h,
                             preferred_element_type=jnp.float32)      # (B,S,dH) f32
            ctx_heads.append(ctx.reshape(bs, HEAD_DIM))

        # single output-projection matmul over all heads
        ctx_all = jnp.concatenate(ctx_heads, axis=-1)                 # (BS, H) f32
        attn = _mm(ctx_all, wo_ref[l]) + _vrow(vec_ref, base + _VR_BO, HIDDEN)

        h = _layernorm(attn + h,
                       _vrow(vec_ref, base + _VR_LN1G, HIDDEN),
                       _vrow(vec_ref, base + _VR_LN1B, HIDDEN))       # add + LN1

        inter = _gelu(_mm(h, w1_ref[l]) + _vrow(vec_ref, base + _VR_B1, FFN))
        ffn = _mm(inter, w2_ref[l]) + _vrow(vec_ref, base + _VR_B2, HIDDEN)
        h = _layernorm(ffn + h,
                       _vrow(vec_ref, base + _VR_LN2G, HIDDEN),
                       _vrow(vec_ref, base + _VR_LN2B, HIDDEN))       # add + LN2

    # --- classifier ---
    logits = _mm(h, wcls_ref[...]) + _vrow(vec_ref, _VR_BCLS, VOCAB)  # (BS, V) f32

    if mode == "softmax":
        m = jnp.max(logits, axis=-1, keepdims=True)
        z = jnp.sum(jnp.exp(logits - m), axis=-1, keepdims=True)
        # exp(x - m - log z): normalization on the EUP instead of an f32 divide
        out_ref[...] = jnp.exp(logits - m - jnp.log(z))
    else:
        # fused cross-entropy: per-token loss, logits never leave the chip
        m = jnp.max(logits, axis=-1, keepdims=True)
        lse = m + jnp.log(jnp.sum(jnp.exp(logits - m), axis=-1, keepdims=True))
        col = lax.broadcasted_iota(jnp.int32, logits.shape, 1)
        picked = jnp.sum(jnp.where(col == lbl_ref[...], logits, 0.0),
                         axis=-1, keepdims=True)
        out_ref[...] = lse - picked                                   # (BS, 1)


def _run_model(emb2d, params, *, batch, seq, labels=None):
    mode = "loss" if labels is not None else "softmax"
    inputs = [emb2d, params["wqkv"], params["wo"], params["w1"], params["w2"],
              params["w_cls"], params["vecs"]]
    if labels is not None:
        inputs.append(labels)

    out_cols = 1 if mode == "loss" else VOCAB
    kern = functools.partial(_model_kernel, batch=batch, seq=seq, mode=mode)

    # grid-less call: the whole (folded-batch) model runs in a single kernel
    # step; every operand is one full-array VMEM block (7-8 DMAs total).
    return pl.pallas_call(
        kern,
        out_shape=jax.ShapeDtypeStruct((batch * seq, out_cols), jnp.float32),
    )(*inputs)


# ------------------------------ parameter init ------------------------------
def init_params(key):
    keys = iter(jax.random.split(key, 16))

    def nrm(shape):
        return 0.02 * jax.random.normal(next(keys), shape, jnp.float32)

    def w_bf16(shape):                 # matmul weights stored in bf16
        return nrm(shape).astype(jnp.bfloat16)

    def row(v):
        v = jnp.asarray(v, jnp.float32).reshape(-1)
        return jnp.pad(v, (0, VEC_WIDTH - v.shape[0]))

    # packed f32 vector slab: [emb_ln_g, emb_ln_b, per-layer x8, b_cls]
    rows = [row(jnp.ones(HIDDEN)), row(jnp.zeros(HIDDEN))]
    for _ in range(N_LAYERS):
        rows += [row(jnp.zeros(3 * HIDDEN)),   # bqkv
                 row(jnp.zeros(HIDDEN)),       # bo
                 row(jnp.ones(HIDDEN)),        # ln1 gamma
                 row(jnp.zeros(HIDDEN)),       # ln1 beta
                 row(jnp.zeros(FFN)),          # b1
                 row(jnp.zeros(HIDDEN)),       # b2
                 row(jnp.ones(HIDDEN)),        # ln2 gamma
                 row(jnp.zeros(HIDDEN))]       # ln2 beta
    rows.append(row(jnp.zeros(VOCAB)))         # classifier bias
    vecs = jnp.stack(rows, axis=0)             # (VEC_ROWS, 128) f32

    return dict(
        word_emb=nrm((VOCAB, HIDDEN)),
        pos_emb=nrm((MAX_POS, HIDDEN)),
        type_emb=nrm((2, HIDDEN)),
        wqkv=w_bf16((N_LAYERS, HIDDEN, 3 * HIDDEN)),   # wq|wk|wv fused, layer-stacked
        wo=w_bf16((N_LAYERS, HIDDEN, HIDDEN)),
        w1=w_bf16((N_LAYERS, HIDDEN, FFN)),
        w2=w_bf16((N_LAYERS, FFN, HIDDEN)),
        w_cls=w_bf16((HIDDEN, VOCAB)),
        vecs=vecs,
    )


# -------------------------------- forward pass --------------------------------
def forward(params, x, y=None):
    """Mirrors LanguageModel.forward: softmax(probs) if y is None, else CE loss."""
    B, S = x.shape

    # glue: embedding gathers + 3-way add (tiny); LayerNorm runs inside the kernel.
    # TODO(synk): no attention mask / segment ids; token_type 0 embedding only.
    emb = (params["word_emb"][x]
           + params["pos_emb"][:S][None, :, :]
           + params["type_emb"][0][None, None, :]).astype(jnp.float32)   # [B,S,H]
    emb2d = emb.reshape(B * S, HIDDEN)
    # dropout is defined in the torch module but unused in forward (identity)

    if y is not None:
        labels = y.reshape(B * S, 1).astype(jnp.int32)
        loss_tok = _run_model(emb2d, params, batch=B, seq=S, labels=labels)  # (BS,1)
        # glue: mean over tokens, matching F.cross_entropy(..., reduction='mean')
        return jnp.mean(loss_tok)

    probs = _run_model(emb2d, params, batch=B, seq=S)       # (BS, V) probabilities
    return probs.reshape(B, S, VOCAB)


# ------------------------------------ main ------------------------------------
if __name__ == "__main__":
    key = jax.random.PRNGKey(0)
    k_params, k_x, k_y = jax.random.split(key, 3)

    params = init_params(k_params)

    B, S = 2, 8
    token_ids = jax.random.randint(k_x, (B, S), 0, VOCAB, dtype=jnp.int32)
    labels = jax.random.randint(k_y, (B, S), 0, VOCAB, dtype=jnp.int32)

    probs = forward(params, token_ids)           # inference path (softmax)
    loss = forward(params, token_ids, labels)    # training path (fused CE)

    probs = jax.block_until_ready(probs)
    loss = jax.block_until_ready(loss)

    assert probs.shape == (B, S, VOCAB)
    assert bool(jnp.all(jnp.isfinite(probs))) and bool(jnp.isfinite(loss))
    # rows of the softmax output should sum to ~1
    assert bool(jnp.allclose(jnp.sum(probs, axis=-1), 1.0, atol=1e-4))

    print("KERNEL_OK")
</pallas_src>

<mosaic_0001>
module attributes {stable_mosaic.version = 11 : i64} {
  func.func @_model_kernel(%arg0: memref<16x32xf32, #tpu.memory_space<vmem>>, %arg1: memref<2x32x96xbf16, #tpu.memory_space<vmem>>, %arg2: memref<2x32x32xbf16, #tpu.memory_space<vmem>>, %arg3: memref<2x32x64xbf16, #tpu.memory_space<vmem>>, %arg4: memref<2x64x32xbf16, #tpu.memory_space<vmem>>, %arg5: memref<32x128xbf16, #tpu.memory_space<vmem>>, %arg6: memref<19x128xf32, #tpu.memory_space<vmem>>, %arg7: memref<16x128xf32, #tpu.memory_space<vmem>>) attributes {dimension_semantics = [], scalar_prefetch = 0 : i64, scratch_operands = 0 : i64, tpu.core_type = #tpu.core_type<tc>} {
    %c0 = arith.constant 0 : index
    %c0_0 = arith.constant 0 : index
    %0 = vector.load %arg0[%c0, %c0_0] : memref<16x32xf32, #tpu.memory_space<vmem>>, vector<16x32xf32>
    %c0_1 = arith.constant 0 : index
    %c0_2 = arith.constant 0 : index
    %1 = vector.load %arg6[%c0_1, %c0_2] : memref<19x128xf32, #tpu.memory_space<vmem>>, vector<1x32xf32>
    %c1 = arith.constant 1 : index
    %c0_3 = arith.constant 0 : index
    %2 = vector.load %arg6[%c1, %c0_3] : memref<19x128xf32, #tpu.memory_space<vmem>>, vector<1x32xf32>
    %cst = arith.constant dense<0.000000e+00> : vector<16xf32>
    %3 = vector.multi_reduction <add>, %0, %cst [1] : vector<16x32xf32> to vector<16xf32>
    %4 = vector.shape_cast %3 : vector<16xf32> to vector<16x1xf32>
    %cst_4 = arith.constant 3.200000e+01 : f32
    %5 = vector.broadcast %cst_4 : f32 to vector<16x1xf32>
    %6 = arith.divf %4, %5 : vector<16x1xf32>
    %7 = vector.broadcast %6 : vector<16x1xf32> to vector<16x32xf32>
    %8 = arith.subf %0, %7 : vector<16x32xf32>
    %9 = arith.mulf %8, %8 : vector<16x32xf32>
    %cst_5 = arith.constant dense<0.000000e+00> : vector<16xf32>
    %10 = vector.multi_reduction <add>, %9, %cst_5 [1] : vector<16x32xf32> to vector<16xf32>
    %11 = vector.shape_cast %10 : vector<16xf32> to vector<16x1xf32>
    %cst_6 = arith.constant 3.200000e+01 : f32
    %12 = vector.broadcast %cst_6 : f32 to vector<16x1xf32>
    %13 = arith.divf %11, %12 : vector<16x1xf32>
    %cst_7 = arith.constant 9.99999996E-13 : f32
    %14 = vector.broadcast %cst_7 : f32 to vector<16x1xf32>
    %15 = arith.addf %13, %14 : vector<16x1xf32>
    %16 = math.rsqrt %15 : vector<16x1xf32>
    %17 = vector.broadcast %16 : vector<16x1xf32> to vector<16x32xf32>
    %18 = arith.mulf %8, %17 : vector<16x32xf32>
    %19 = vector.broadcast %1 : vector<1x32xf32> to vector<16x32xf32>
    %20 = arith.mulf %18, %19 : vector<16x32xf32>
    %21 = vector.broadcast %2 : vector<1x32xf32> to vector<16x32xf32>
    %22 = arith.addf %20, %21 : vector<16x32xf32>
    %c0_8 = arith.constant 0 : index
    %c0_9 = arith.constant 0 : index
    %c0_10 = arith.constant 0 : index
    %23 = vector.load %arg1[%c0_8, %c0_9, %c0_10] : memref<2x32x96xbf16, #tpu.memory_space<vmem>>, vector<1x32x96xbf16>
    %24 = vector.shape_cast %23 : vector<1x32x96xbf16> to vector<32x96xbf16>
    %25 = arith.truncf %22 : vector<16x32xf32> to vector<16x32xbf16>
    %cst_11 = arith.constant dense<0.000000e+00> : vector<16x96xf32>
    %26 = tpu.matmul %25, %24, %cst_11 {dimension_numbers = #tpu.dot_dimension_numbers<[1], [0], [0], [1], [0, 0, 1, 1], [], []>} : vector<16x32xbf16>, vector<32x96xbf16>, vector<16x96xf32> -> vector<16x96xf32>
    %c2 = arith.constant 2 : index
    %c0_12 = arith.constant 0 : index
    %27 = vector.load %arg6[%c2, %c0_12] : memref<19x128xf32, #tpu.memory_space<vmem>>, vector<1x96xf32>
    %28 = vector.broadcast %27 : vector<1x96xf32> to vector<16x96xf32>
    %29 = arith.addf %26, %28 : vector<16x96xf32>
    %30 = arith.truncf %29 : vector<16x96xf32> to vector<16x96xbf16>
    %31 = vector.extract_strided_slice %30 {offsets = [0, 0], sizes = [16, 16], strides = [1, 1]} : vector<16x96xbf16> to vector<16x16xbf16>
    %32 = vector.shape_cast %31 : vector<16x16xbf16> to vector<2x8x16xbf16>
    %33 = vector.extract_strided_slice %30 {offsets = [0, 32], sizes = [16, 16], strides = [1, 1]} : vector<16x96xbf16> to vector<16x16xbf16>
    %34 = vector.shape_cast %33 : vector<16x16xbf16> to vector<2x8x16xbf16>
    %35 = vector.extract_strided_slice %30 {offsets = [0, 64], sizes = [16, 16], strides = [1, 1]} : vector<16x96xbf16> to vector<16x16xbf16>
    %36 = vector.shape_cast %35 : vector<16x16xbf16> to vector<2x8x16xbf16>
    "tpu.trace_start"() <{level = 10 : i32, message = "bqd,bkd->bqk"}> : () -> ()
    %cst_13 = arith.constant dense<0.000000e+00> : vector<2x8x8xf32>
    %37 = tpu.matmul %32, %34, %cst_13 {dimension_numbers = #tpu.dot_dimension_numbers<[2], [2], [1], [1], [0, 0, 0, 1, 1, 1], [0], [0]>} : vector<2x8x16xbf16>, vector<2x8x16xbf16>, vector<2x8x8xf32> -> vector<2x8x8xf32>
    "tpu.trace_stop"() : () -> ()
    %cst_14 = arith.constant 2.500000e-01 : f32
    %38 = vector.broadcast %cst_14 : f32 to vector<2x8x8xf32>
    %39 = arith.mulf %37, %38 : vector<2x8x8xf32>
    %cst_15 = arith.constant dense<0xFF800000> : vector<2x8xf32>
    %40 = vector.multi_reduction <maximumf>, %39, %cst_15 [2] : vector<2x8x8xf32> to vector<2x8xf32>
    %41 = vector.shape_cast %40 : vector<2x8xf32> to vector<2x8x1xf32>
    %42 = vector.broadcast %41 : vector<2x8x1xf32> to vector<2x8x8xf32>
    %43 = arith.subf %39, %42 : vector<2x8x8xf32>
    %44 = math.exp %43 : vector<2x8x8xf32>
    %cst_16 = arith.constant dense<0.000000e+00> : vector<2x8xf32>
    %45 = vector.multi_reduction <add>, %44, %cst_16 [2] : vector<2x8x8xf32> to vector<2x8xf32>
    %46 = vector.shape_cast %45 : vector<2x8xf32> to vector<2x8x1xf32>
    %47 = tpu.reciprocal %46 {approx = true} : vector<2x8x1xf32> -> vector<2x8x1xf32>
    %48 = vector.broadcast %47 : vector<2x8x1xf32> to vector<2x8x8xf32>
    %49 = arith.mulf %44, %48 : vector<2x8x8xf32>
    %50 = arith.truncf %49 : vector<2x8x8xf32> to vector<2x8x8xbf16>
    "tpu.trace_start"() <{level = 10 : i32, message = "bqk,bkd->bqd"}> : () -> ()
    %cst_17 = arith.constant dense<0.000000e+00> : vector<2x8x16xf32>
    %51 = tpu.matmul %50, %36, %cst_17 {dimension_numbers = #tpu.dot_dimension_numbers<[2], [1], [1], [2], [0, 0, 0, 1, 1, 2], [0], [0]>} : vector<2x8x8xbf16>, vector<2x8x16xbf16>, vector<2x8x16xf32> -> vector<2x8x16xf32>
    "tpu.trace_stop"() : () -> ()
    %52 = vector.shape_cast %51 : vector<2x8x16xf32> to vector<16x16xf32>
    %53 = vector.extract_strided_slice %30 {offsets = [0, 16], sizes = [16, 16], strides = [1, 1]} : vector<16x96xbf16> to vector<16x16xbf16>
    %54 = vector.shape_cast %53 : vector<16x16xbf16> to vector<2x8x16xbf16>
    %55 = vector.extract_strided_slice %30 {offsets = [0, 48], sizes = [16, 16], strides = [1, 1]} : vector<16x96xbf16> to vector<16x16xbf16>
    %56 = vector.shape_cast %55 : vector<16x16xbf16> to vector<2x8x16xbf16>
    %57 = vector.extract_strided_slice %30 {offsets = [0, 80], sizes = [16, 16], strides = [1, 1]} : vector<16x96xbf16> to vector<16x16xbf16>
    %58 = vector.shape_cast %57 : vector<16x16xbf16> to vector<2x8x16xbf16>
    "tpu.trace_start"() <{level = 10 : i32, message = "bqd,bkd->bqk"}> : () -> ()
    %cst_18 = arith.constant dense<0.000000e+00> : vector<2x8x8xf32>
    %59 = tpu.matmul %54, %56, %cst_18 {dimension_numbers = #tpu.dot_dimension_numbers<[2], [2], [1], [1], [0, 0, 0, 1, 1, 1], [0], [0]>} : vector<2x8x16xbf16>, vector<2x8x16xbf16>, vector<2x8x8xf32> -> vector<2x8x8xf32>
    "tpu.trace_stop"() : () -> ()
    %cst_19 = arith.constant 2.500000e-01 : f32
    %60 = vector.broadcast %cst_19 : f32 to vector<2x8x8xf32>
    %61 = arith.mulf %59, %60 : vector<2x8x8xf32>
    %cst_20 = arith.constant dense<0xFF800000> : vector<2x8xf32>
    %62 = vector.multi_reduction <maximumf>, %61, %cst_20 [2] : vector<2x8x8xf32> to vector<2x8xf32>
    %63 = vector.shape_cast %62 : vector<2x8xf32> to vector<2x8x1xf32>
    %64 = vector.broadcast %63 : vector<2x8x1xf32> to vector<2x8x8xf32>
    %65 = arith.subf %61, %64 : vector<2x8x8xf32>
    %66 = math.exp %65 : vector<2x8x8xf32>
    %cst_21 = arith.constant dense<0.000000e+00> : vector<2x8xf32>
    %67 = vector.multi_reduction <add>, %66, %cst_21 [2] : vector<2x8x8xf32> to vector<2x8xf32>
    %68 = vector.shape_cast %67 : vector<2x8xf32> to vector<2x8x1xf32>
    %69 = tpu.reciprocal %68 {approx = true} : vector<2x8x1xf32> -> vector<2x8x1xf32>
    %70 = vector.broadcast %69 : vector<2x8x1xf32> to vector<2x8x8xf32>
    %71 = arith.mulf %66, %70 : vector<2x8x8xf32>
    %72 = arith.truncf %71 : vector<2x8x8xf32> to vector<2x8x8xbf16>
    "tpu.trace_start"() <{level = 10 : i32, message = "bqk,bkd->bqd"}> : () -> ()
    %cst_22 = arith.constant dense<0.000000e+00> : vector<2x8x16xf32>
    %73 = tpu.matmul %72, %58, %cst_22 {dimension_numbers = #tpu.dot_dimension_numbers<[2], [1], [1], [2], [0, 0, 0, 1, 1, 2], [0], [0]>} : vector<2x8x8xbf16>, vector<2x8x16xbf16>, vector<2x8x16xf32> -> vector<2x8x16xf32>
    "tpu.trace_stop"() : () -> ()
    %74 = vector.shape_cast %73 : vector<2x8x16xf32> to vector<16x16xf32>
    %75 = tpu.concatenate %52, %74 in 1 : vector<16x16xf32>, vector<16x16xf32> -> vector<16x32xf32>
    %c0_23 = arith.constant 0 : index
    %c0_24 = arith.constant 0 : index
    %c0_25 = arith.constant 0 : index
    %76 = vector.load %arg2[%c0_23, %c0_24, %c0_25] : memref<2x32x32xbf16, #tpu.memory_space<vmem>>, vector<1x32x32xbf16>
    %77 = vector.shape_cast %76 : vector<1x32x32xbf16> to vector<32x32xbf16>
    %78 = arith.truncf %75 : vector<16x32xf32> to vector<16x32xbf16>
    %cst_26 = arith.constant dense<0.000000e+00> : vector<16x32xf32>
    %79 = tpu.matmul %78, %77, %cst_26 {dimension_numbers = #tpu.dot_dimension_numbers<[1], [0], [0], [1], [0, 0, 1, 1], [], []>} : vector<16x32xbf16>, vector<32x32xbf16>, vector<16x32xf32> -> vector<16x32xf32>
    %c3 = arith.constant 3 : index
    %c0_27 = arith.constant 0 : index
    %80 = vector.load %arg6[%c3, %c0_27] : memref<19x128xf32, #tpu.memory_space<vmem>>, vector<1x32xf32>
    %81 = vector.broadcast %80 : vector<1x32xf32> to vector<16x32xf32>
    %82 = arith.addf %79, %81 : vector<16x32xf32>
    %83 = arith.addf %82, %22 : vector<16x32xf32>
    %c4 = arith.constant 4 : index
    %c0_28 = arith.constant 0 : index
    %84 = vector.load %arg6[%c4, %c0_28] : memref<19x128xf32, #tpu.memory_space<vmem>>, vector<1x32xf32>
    %c5 = arith.constant 5 : index
    %c0_29 = arith.constant 0 : index
    %85 = vector.load %arg6[%c5, %c0_29] : memref<19x128xf32, #tpu.memory_space<vmem>>, vector<1x32xf32>
    %cst_30 = arith.constant dense<0.000000e+00> : vector<16xf32>
    %86 = vector.multi_reduction <add>, %83, %cst_30 [1] : vector<16x32xf32> to vector<16xf32>
    %87 = vector.shape_cast %86 : vector<16xf32> to vector<16x1xf32>
    %cst_31 = arith.constant 3.200000e+01 : f32
    %88 = vector.broadcast %cst_31 : f32 to vector<16x1xf32>
    %89 = arith.divf %87, %88 : vector<16x1xf32>
    %90 = vector.broadcast %89 : vector<16x1xf32> to vector<16x32xf32>
    %91 = arith.subf %83, %90 : vector<16x32xf32>
    %92 = arith.mulf %91, %91 : vector<16x32xf32>
    %cst_32 = arith.constant dense<0.000000e+00> : vector<16xf32>
    %93 = vector.multi_reduction <add>, %92, %cst_32 [1] : vector<16x32xf32> to vector<16xf32>
    %94 = vector.shape_cast %93 : vector<16xf32> to vector<16x1xf32>
    %cst_33 = arith.constant 3.200000e+01 : f32
    %95 = vector.broadcast %cst_33 : f32 to vector<16x1xf32>
    %96 = arith.divf %94, %95 : vector<16x1xf32>
    %cst_34 = arith.constant 9.99999996E-13 : f32
    %97 = vector.broadcast %cst_34 : f32 to vector<16x1xf32>
    %98 = arith.addf %96, %97 : vector<16x1xf32>
    %99 = math.rsqrt %98 : vector<16x1xf32>
    %100 = vector.broadcast %99 : vector<16x1xf32> to vector<16x32xf32>
    %101 = arith.mulf %91, %100 : vector<16x32xf32>
    %102 = vector.broadcast %84 : vector<1x32xf32> to vector<16x32xf32>
    %103 = arith.mulf %101, %102 : vector<16x32xf32>
    %104 = vector.broadcast %85 : vector<1x32xf32> to vector<16x32xf32>
    %105 = arith.addf %103, %104 : vector<16x32xf32>
    %c0_35 = arith.constant 0 : index
    %c0_36 = arith.constant 0 : index
    %c0_37 = arith.constant 0 : index
    %106 = vector.load %arg3[%c0_35, %c0_36, %c0_37] : memref<2x32x64xbf16, #tpu.memory_space<vmem>>, vector<1x32x64xbf16>
    %107 = vector.shape_cast %106 : vector<1x32x64xbf16> to vector<32x64xbf16>
    %108 = arith.truncf %105 : vector<16x32xf32> to vector<16x32xbf16>
    %cst_38 = arith.constant dense<0.000000e+00> : vector<16x64xf32>
    %109 = tpu.matmul %108, %107, %cst_38 {dimension_numbers = #tpu.dot_dimension_numbers<[1], [0], [0], [1], [0, 0, 1, 1], [], []>} : vector<16x32xbf16>, vector<32x64xbf16>, vector<16x64xf32> -> vector<16x64xf32>
    %c6 = arith.constant 6 : index
    %c0_39 = arith.constant 0 : index
    %110 = vector.load %arg6[%c6, %c0_39] : memref<19x128xf32, #tpu.memory_space<vmem>>, vector<1x64xf32>
    %111 = vector.broadcast %110 : vector<1x64xf32> to vector<16x64xf32>
    %112 = arith.addf %109, %111 : vector<16x64xf32>
    %cst_40 = arith.constant 5.000000e-01 : f32
    %113 = vector.broadcast %cst_40 : f32 to vector<16x64xf32>
    %114 = arith.mulf %113, %112 : vector<16x64xf32>
    %cst_41 = arith.constant 4.471500e-02 : f32
    %115 = vector.broadcast %cst_41 : f32 to vector<16x64xf32>
    %116 = arith.mulf %115, %112 : vector<16x64xf32>
    %117 = arith.mulf %116, %112 : vector<16x64xf32>
    %118 = arith.mulf %117, %112 : vector<16x64xf32>
    %119 = arith.addf %112, %118 : vector<16x64xf32>
    %cst_42 = arith.constant 0.797884583 : f32
    %120 = vector.broadcast %cst_42 : f32 to vector<16x64xf32>
    %121 = arith.mulf %120, %119 : vector<16x64xf32>
    %122 = math.tanh %121 : vector<16x64xf32>
    %cst_43 = arith.constant 1.000000e+00 : f32
    %123 = vector.broadcast %cst_43 : f32 to vector<16x64xf32>
    %124 = arith.addf %123, %122 : vector<16x64xf32>
    %125 = arith.mulf %114, %124 : vector<16x64xf32>
    %c0_44 = arith.constant 0 : index
    %c0_45 = arith.constant 0 : index
    %c0_46 = arith.constant 0 : index
    %126 = vector.load %arg4[%c0_44, %c0_45, %c0_46] : memref<2x64x32xbf16, #tpu.memory_space<vmem>>, vector<1x64x32xbf16>
    %127 = vector.shape_cast %126 : vector<1x64x32xbf16> to vector<64x32xbf16>
    %128 = arith.truncf %125 : vector<16x64xf32> to vector<16x64xbf16>
    %cst_47 = arith.constant dense<0.000000e+00> : vector<16x32xf32>
    %129 = tpu.matmul %128, %127, %cst_47 {dimension_numbers = #tpu.dot_dimension_numbers<[1], [0], [0], [1], [0, 0, 1, 1], [], []>} : vector<16x64xbf16>, vector<64x32xbf16>, vector<16x32xf32> -> vector<16x32xf32>
    %c7 = arith.constant 7 : index
    %c0_48 = arith.constant 0 : index
    %130 = vector.load %arg6[%c7, %c0_48] : memref<19x128xf32, #tpu.memory_space<vmem>>, vector<1x32xf32>
    %131 = vector.broadcast %130 : vector<1x32xf32> to vector<16x32xf32>
    %132 = arith.addf %129, %131 : vector<16x32xf32>
    %133 = arith.addf %132, %105 : vector<16x32xf32>
    %c8 = arith.constant 8 : index
    %c0_49 = arith.constant 0 : index
    %134 = vector.load %arg6[%c8, %c0_49] : memref<19x128xf32, #tpu.memory_space<vmem>>, vector<1x32xf32>
    %c9 = arith.constant 9 : index
    %c0_50 = arith.constant 0 : index
    %135 = vector.load %arg6[%c9, %c0_50] : memref<19x128xf32, #tpu.memory_space<vmem>>, vector<1x32xf32>
    %cst_51 = arith.constant dense<0.000000e+00> : vector<16xf32>
    %136 = vector.multi_reduction <add>, %133, %cst_51 [1] : vector<16x32xf32> to vector<16xf32>
    %137 = vector.shape_cast %136 : vector<16xf32> to vector<16x1xf32>
    %cst_52 = arith.constant 3.200000e+01 : f32
    %138 = vector.broadcast %cst_52 : f32 to vector<16x1xf32>
    %139 = arith.divf %137, %138 : vector<16x1xf32>
    %140 = vector.broadcast %139 : vector<16x1xf32> to vector<16x32xf32>
    %141 = arith.subf %133, %140 : vector<16x32xf32>
    %142 = arith.mulf %141, %141 : vector<16x32xf32>
    %cst_53 = arith.constant dense<0.000000e+00> : vector<16xf32>
    %143 = vector.multi_reduction <add>, %142, %cst_53 [1] : vector<16x32xf32> to vector<16xf32>
    %144 = vector.shape_cast %143 : vector<16xf32> to vector<16x1xf32>
    %cst_54 = arith.constant 3.200000e+01 : f32
    %145 = vector.broadcast %cst_54 : f32 to vector<16x1xf32>
    %146 = arith.divf %144, %145 : vector<16x1xf32>
    %cst_55 = arith.constant 9.99999996E-13 : f32
    %147 = vector.broadcast %cst_55 : f32 to vector<16x1xf32>
    %148 = arith.addf %146, %147 : vector<16x1xf32>
    %149 = math.rsqrt %148 : vector<16x1xf32>
    %150 = vector.broadcast %149 : vector<16x1xf32> to vector<16x32xf32>
    %151 = arith.mulf %141, %150 : vector<16x32xf32>
    %152 = vector.broadcast %134 : vector<1x32xf32> to vector<16x32xf32>
    %153 = arith.mulf %151, %152 : vector<16x32xf32>
    %154 = vector.broadcast %135 : vector<1x32xf32> to vector<16x32xf32>
    %155 = arith.addf %153, %154 : vector<16x32xf32>
    %c1_56 = arith.constant 1 : index
    %c0_57 = arith.constant 0 : index
    %c0_58 = arith.constant 0 : index
    %156 = vector.load %arg1[%c1_56, %c0_57, %c0_58] : memref<2x32x96xbf16, #tpu.memory_space<vmem>>, vector<1x32x96xbf16>
    %157 = vector.shape_cast %156 : vector<1x32x96xbf16> to vector<32x96xbf16>
    %158 = arith.truncf %155 : vector<16x32xf32> to vector<16x32xbf16>
    %cst_59 = arith.constant dense<0.000000e+00> : vector<16x96xf32>
    %159 = tpu.matmul %158, %157, %cst_59 {dimension_numbers = #tpu.dot_dimension_numbers<[1], [0], [0], [1], [0, 0, 1, 1], [], []>} : vector<16x32xbf16>, vector<32x96xbf16>, vector<16x96xf32> -> vector<16x96xf32>
    %c10 = arith.constant 10 : index
    %c0_60 = arith.constant 0 : index
    %160 = vector.load %arg6[%c10, %c0_60] : memref<19x128xf32, #tpu.memory_space<vmem>>, vector<1x96xf32>
    %161 = vector.broadcast %160 : vector<1x96xf32> to vector<16x96xf32>
    %162 = arith.addf %159, %161 : vector<16x96xf32>
    %163 = arith.truncf %162 : vector<16x96xf32> to vector<16x96xbf16>
    %164 = vector.extract_strided_slice %163 {offsets = [0, 0], sizes = [16, 16], strides = [1, 1]} : vector<16x96xbf16> to vector<16x16xbf16>
    %165 = vector.shape_cast %164 : vector<16x16xbf16> to vector<2x8x16xbf16>
    %166 = vector.extract_strided_slice %163 {offsets = [0, 32], sizes = [16, 16], strides = [1, 1]} : vector<16x96xbf16> to vector<16x16xbf16>
    %167 = vector.shape_cast %166 : vector<16x16xbf16> to vector<2x8x16xbf16>
    %168 = vector.extract_strided_slice %163 {offsets = [0, 64], sizes = [16, 16], strides = [1, 1]} : vector<16x96xbf16> to vector<16x16xbf16>
    %169 = vector.shape_cast %168 : vector<16x16xbf16> to vector<2x8x16xbf16>
    "tpu.trace_start"() <{level = 10 : i32, message = "bqd,bkd->bqk"}> : () -> ()
    %cst_61 = arith.constant dense<0.000000e+00> : vector<2x8x8xf32>
    %170 = tpu.matmul %165, %167, %cst_61 {dimension_numbers = #tpu.dot_dimension_numbers<[2], [2], [1], [1], [0, 0, 0, 1, 1, 1], [0], [0]>} : vector<2x8x16xbf16>, vector<2x8x16xbf16>, vector<2x8x8xf32> -> vector<2x8x8xf32>
    "tpu.trace_stop"() : () -> ()
    %cst_62 = arith.constant 2.500000e-01 : f32
    %171 = vector.broadcast %cst_62 : f32 to vector<2x8x8xf32>
    %172 = arith.mulf %170, %171 : vector<2x8x8xf32>
    %cst_63 = arith.constant dense<0xFF800000> : vector<2x8xf32>
    %173 = vector.multi_reduction <maximumf>, %172, %cst_63 [2] : vector<2x8x8xf32> to vector<2x8xf32>
    %174 = vector.shape_cast %173 : vector<2x8xf32> to vector<2x8x1xf32>
    %175 = vector.broadcast %174 : vector<2x8x1xf32> to vector<2x8x8xf32>
    %176 = arith.subf %172, %175 : vector<2x8x8xf32>
    %177 = math.exp %176 : vector<2x8x8xf32>
    %cst_64 = arith.constant dense<0.000000e+00> : vector<2x8xf32>
    %178 = vector.multi_reduction <add>, %177, %cst_64 [2] : vector<2x8x8xf32> to vector<2x8xf32>
    %179 = vector.shape_cast %178 : vector<2x8xf32> to vector<2x8x1xf32>
    %180 = tpu.reciprocal %179 {approx = true} : vector<2x8x1xf32> -> vector<2x8x1xf32>
    %181 = vector.broadcast %180 : vector<2x8x1xf32> to vector<2x8x8xf32>
    %182 = arith.mulf %177, %181 : vector<2x8x8xf32>
    %183 = arith.truncf %182 : vector<2x8x8xf32> to vector<2x8x8xbf16>
    "tpu.trace_start"() <{level = 10 : i32, message = "bqk,bkd->bqd"}> : () -> ()
    %cst_65 = arith.constant dense<0.000000e+00> : vector<2x8x16xf32>
    %184 = tpu.matmul %183, %169, %cst_65 {dimension_numbers = #tpu.dot_dimension_numbers<[2], [1], [1], [2], [0, 0, 0, 1, 1, 2], [0], [0]>} : vector<2x8x8xbf16>, vector<2x8x16xbf16>, vector<2x8x16xf32> -> vector<2x8x16xf32>
    "tpu.trace_stop"() : () -> ()
    %185 = vector.shape_cast %184 : vector<2x8x16xf32> to vector<16x16xf32>
    %186 = vector.extract_strided_slice %163 {offsets = [0, 16], sizes = [16, 16], strides = [1, 1]} : vector<16x96xbf16> to vector<16x16xbf16>
    %187 = vector.shape_cast %186 : vector<16x16xbf16> to vector<2x8x16xbf16>
    %188 = vector.extract_strided_slice %163 {offsets = [0, 48], sizes = [16, 16], strides = [1, 1]} : vector<16x96xbf16> to vector<16x16xbf16>
    %189 = vector.shape_cast %188 : vector<16x16xbf16> to vector<2x8x16xbf16>
    %190 = vector.extract_strided_slice %163 {offsets = [0, 80], sizes = [16, 16], strides = [1, 1]} : vector<16x96xbf16> to vector<16x16xbf16>
    %191 = vector.shape_cast %190 : vector<16x16xbf16> to vector<2x8x16xbf16>
    "tpu.trace_start"() <{level = 10 : i32, message = "bqd,bkd->bqk"}> : () -> ()
    %cst_66 = arith.constant dense<0.000000e+00> : vector<2x8x8xf32>
    %192 = tpu.matmul %187, %189, %cst_66 {dimension_numbers = #tpu.dot_dimension_numbers<[2], [2], [1], [1], [0, 0, 0, 1, 1, 1], [0], [0]>} : vector<2x8x16xbf16>, vector<2x8x16xbf16>, vector<2x8x8xf32> -> vector<2x8x8xf32>
    "tpu.trace_stop"() : () -> ()
    %cst_67 = arith.constant 2.500000e-01 : f32
    %193 = vector.broadcast %cst_67 : f32 to vector<2x8x8xf32>
    %194 = arith.mulf %192, %193 : vector<2x8x8xf32>
    %cst_68 = arith.constant dense<0xFF800000> : vector<2x8xf32>
    %195 = vector.multi_reduction <maximumf>, %194, %cst_68 [2] : vector<2x8x8xf32> to vector<2x8xf32>
    %196 = vector.shape_cast %195 : vector<2x8xf32> to vector<2x8x1xf32>
    %197 = vector.broadcast %196 : vector<2x8x1xf32> to vector<2x8x8xf32>
    %198 = arith.subf %194, %197 : vector<2x8x8xf32>
    %199 = math.exp %198 : vector<2x8x8xf32>
    %cst_69 = arith.constant dense<0.000000e+00> : vector<2x8xf32>
    %200 = vector.multi_reduction <add>, %199, %cst_69 [2] : vector<2x8x8xf32> to vector<2x8xf32>
    %201 = vector.shape_cast %200 : vector<2x8xf32> to vector<2x8x1xf32>
    %202 = tpu.reciprocal %201 {approx = true} : vector<2x8x1xf32> -> vector<2x8x1xf32>
    %203 = vector.broadcast %202 : vector<2x8x1xf32> to vector<2x8x8xf32>
    %204 = arith.mulf %199, %203 : vector<2x8x8xf32>
    %205 = arith.truncf %204 : vector<2x8x8xf32> to vector<2x8x8xbf16>
    "tpu.trace_start"() <{level = 10 : i32, message = "bqk,bkd->bqd"}> : () -> ()
    %cst_70 = arith.constant dense<0.000000e+00> : vector<2x8x16xf32>
    %206 = tpu.matmul %205, %191, %cst_70 {dimension_numbers = #tpu.dot_dimension_numbers<[2], [1], [1], [2], [0, 0, 0, 1, 1, 2], [0], [0]>} : vector<2x8x8xbf16>, vector<2x8x16xbf16>, vector<2x8x16xf32> -> vector<2x8x16xf32>
    "tpu.trace_stop"() : () -> ()
    %207 = vector.shape_cast %206 : vector<2x8x16xf32> to vector<16x16xf32>
    %208 = tpu.concatenate %185, %207 in 1 : vector<16x16xf32>, vector<16x16xf32> -> vector<16x32xf32>
    %c1_71 = arith.constant 1 : index
    %c0_72 = arith.constant 0 : index
    %c0_73 = arith.constant 0 : index
    %209 = vector.load %arg2[%c1_71, %c0_72, %c0_73] : memref<2x32x32xbf16, #tpu.memory_space<vmem>>, vector<1x32x32xbf16>
    %210 = vector.shape_cast %209 : vector<1x32x32xbf16> to vector<32x32xbf16>
    %211 = arith.truncf %208 : vector<16x32xf32> to vector<16x32xbf16>
    %cst_74 = arith.constant dense<0.000000e+00> : vector<16x32xf32>
    %212 = tpu.matmul %211, %210, %cst_74 {dimension_numbers = #tpu.dot_dimension_numbers<[1], [0], [0], [1], [0, 0, 1, 1], [], []>} : vector<16x32xbf16>, vector<32x32xbf16>, vector<16x32xf32> -> vector<16x32xf32>
    %c11 = arith.constant 11 : index
    %c0_75 = arith.constant 0 : index
    %213 = vector.load %arg6[%c11, %c0_75] : memref<19x128xf32, #tpu.memory_space<vmem>>, vector<1x32xf32>
    %214 = vector.broadcast %213 : vector<1x32xf32> to vector<16x32xf32>
    %215 = arith.addf %212, %214 : vector<16x32xf32>
    %216 = arith.addf %215, %155 : vector<16x32xf32>
    %c12 = arith.constant 12 : index
    %c0_76 = arith.constant 0 : index
    %217 = vector.load %arg6[%c12, %c0_76] : memref<19x128xf32, #tpu.memory_space<vmem>>, vector<1x32xf32>
    %c13 = arith.constant 13 : index
    %c0_77 = arith.constant 0 : index
    %218 = vector.load %arg6[%c13, %c0_77] : memref<19x128xf32, #tpu.memory_space<vmem>>, vector<1x32xf32>
    %cst_78 = arith.constant dense<0.000000e+00> : vector<16xf32>
    %219 = vector.multi_reduction <add>, %216, %cst_78 [1] : vector<16x32xf32> to vector<16xf32>
    %220 = vector.shape_cast %219 : vector<16xf32> to vector<16x1xf32>
    %cst_79 = arith.constant 3.200000e+01 : f32
    %221 = vector.broadcast %cst_79 : f32 to vector<16x1xf32>
    %222 = arith.divf %220, %221 : vector<16x1xf32>
    %223 = vector.broadcast %222 : vector<16x1xf32> to vector<16x32xf32>
    %224 = arith.subf %216, %223 : vector<16x32xf32>
    %225 = arith.mulf %224, %224 : vector<16x32xf32>
    %cst_80 = arith.constant dense<0.000000e+00> : vector<16xf32>
    %226 = vector.multi_reduction <add>, %225, %cst_80 [1] : vector<16x32xf32> to vector<16xf32>
    %227 = vector.shape_cast %226 : vector<16xf32> to vector<16x1xf32>
    %cst_81 = arith.constant 3.200000e+01 : f32
    %228 = vector.broadcast %cst_81 : f32 to vector<16x1xf32>
    %229 = arith.divf %227, %228 : vector<16x1xf32>
    %cst_82 = arith.constant 9.99999996E-13 : f32
    %230 = vector.broadcast %cst_82 : f32 to vector<16x1xf32>
    %231 = arith.addf %229, %230 : vector<16x1xf32>
    %232 = math.rsqrt %231 : vector<16x1xf32>
    %233 = vector.broadcast %232 : vector<16x1xf32> to vector<16x32xf32>
    %234 = arith.mulf %224, %233 : vector<16x32xf32>
    %235 = vector.broadcast %217 : vector<1x32xf32> to vector<16x32xf32>
    %236 = arith.mulf %234, %235 : vector<16x32xf32>
    %237 = vector.broadcast %218 : vector<1x32xf32> to vector<16x32xf32>
    %238 = arith.addf %236, %237 : vector<16x32xf32>
    %c1_83 = arith.constant 1 : index
    %c0_84 = arith.constant 0 : index
    %c0_85 = arith.constant 0 : index
    %239 = vector.load %arg3[%c1_83, %c0_84, %c0_85] : memref<2x32x64xbf16, #tpu.memory_space<vmem>>, vector<1x32x64xbf16>
    %240 = vector.shape_cast %239 : vector<1x32x64xbf16> to vector<32x64xbf16>
    %241 = arith.truncf %238 : vector<16x32xf32> to vector<16x32xbf16>
    %cst_86 = arith.constant dense<0.000000e+00> : vector<16x64xf32>
    %242 = tpu.matmul %241, %240, %cst_86 {dimension_numbers = #tpu.dot_dimension_numbers<[1], [0], [0], [1], [0, 0, 1, 1], [], []>} : vector<16x32xbf16>, vector<32x64xbf16>, vector<16x64xf32> -> vector<16x64xf32>
    %c14 = arith.constant 14 : index
    %c0_87 = arith.constant 0 : index
    %243 = vector.load %arg6[%c14, %c0_87] : memref<19x128xf32, #tpu.memory_space<vmem>>, vector<1x64xf32>
    %244 = vector.broadcast %243 : vector<1x64xf32> to vector<16x64xf32>
    %245 = arith.addf %242, %244 : vector<16x64xf32>
    %cst_88 = arith.constant 5.000000e-01 : f32
    %246 = vector.broadcast %cst_88 : f32 to vector<16x64xf32>
    %247 = arith.mulf %246, %245 : vector<16x64xf32>
    %cst_89 = arith.constant 4.471500e-02 : f32
    %248 = vector.broadcast %cst_89 : f32 to vector<16x64xf32>
    %249 = arith.mulf %248, %245 : vector<16x64xf32>
    %250 = arith.mulf %249, %245 : vector<16x64xf32>
    %251 = arith.mulf %250, %245 : vector<16x64xf32>
    %252 = arith.addf %245, %251 : vector<16x64xf32>
    %cst_90 = arith.constant 0.797884583 : f32
    %253 = vector.broadcast %cst_90 : f32 to vector<16x64xf32>
    %254 = arith.mulf %253, %252 : vector<16x64xf32>
    %255 = math.tanh %254 : vector<16x64xf32>
    %cst_91 = arith.constant 1.000000e+00 : f32
    %256 = vector.broadcast %cst_91 : f32 to vector<16x64xf32>
    %257 = arith.addf %256, %255 : vector<16x64xf32>
    %258 = arith.mulf %247, %257 : vector<16x64xf32>
    %c1_92 = arith.constant 1 : index
    %c0_93 = arith.constant 0 : index
    %c0_94 = arith.constant 0 : index
    %259 = vector.load %arg4[%c1_92, %c0_93, %c0_94] : memref<2x64x32xbf16, #tpu.memory_space<vmem>>, vector<1x64x32xbf16>
    %260 = vector.shape_cast %259 : vector<1x64x32xbf16> to vector<64x32xbf16>
    %261 = arith.truncf %258 : vector<16x64xf32> to vector<16x64xbf16>
    %cst_95 = arith.constant dense<0.000000e+00> : vector<16x32xf32>
    %262 = tpu.matmul %261, %260, %cst_95 {dimension_numbers = #tpu.dot_dimension_numbers<[1], [0], [0], [1], [0, 0, 1, 1], [], []>} : vector<16x64xbf16>, vector<64x32xbf16>, vector<16x32xf32> -> vector<16x32xf32>
    %c15 = arith.constant 15 : index
    %c0_96 = arith.constant 0 : index
    %263 = vector.load %arg6[%c15, %c0_96] : memref<19x128xf32, #tpu.memory_space<vmem>>, vector<1x32xf32>
    %264 = vector.broadcast %263 : vector<1x32xf32> to vector<16x32xf32>
    %265 = arith.addf %262, %264 : vector<16x32xf32>
    %266 = arith.addf %265, %238 : vector<16x32xf32>
    %c16 = arith.constant 16 : index
    %c0_97 = arith.constant 0 : index
    %267 = vector.load %arg6[%c16, %c0_97] : memref<19x128xf32, #tpu.memory_space<vmem>>, vector<1x32xf32>
    %c17 = arith.constant 17 : index
    %c0_98 = arith.constant 0 : index
    %268 = vector.load %arg6[%c17, %c0_98] : memref<19x128xf32, #tpu.memory_space<vmem>>, vector<1x32xf32>
    %cst_99 = arith.constant dense<0.000000e+00> : vector<16xf32>
    %269 = vector.multi_reduction <add>, %266, %cst_99 [1] : vector<16x32xf32> to vector<16xf32>
    %270 = vector.shape_cast %269 : vector<16xf32> to vector<16x1xf32>
    %cst_100 = arith.constant 3.200000e+01 : f32
    %271 = vector.broadcast %cst_100 : f32 to vector<16x1xf32>
    %272 = arith.divf %270, %271 : vector<16x1xf32>
    %273 = vector.broadcast %272 : vector<16x1xf32> to vector<16x32xf32>
    %274 = arith.subf %266, %273 : vector<16x32xf32>
    %275 = arith.mulf %274, %274 : vector<16x32xf32>
    %cst_101 = arith.constant dense<0.000000e+00> : vector<16xf32>
    %276 = vector.multi_reduction <add>, %275, %cst_101 [1] : vector<16x32xf32> to vector<16xf32>
    %277 = vector.shape_cast %276 : vector<16xf32> to vector<16x1xf32>
    %cst_102 = arith.constant 3.200000e+01 : f32
    %278 = vector.broadcast %cst_102 : f32 to vector<16x1xf32>
    %279 = arith.divf %277, %278 : vector<16x1xf32>
    %cst_103 = arith.constant 9.99999996E-13 : f32
    %280 = vector.broadcast %cst_103 : f32 to vector<16x1xf32>
    %281 = arith.addf %279, %280 : vector<16x1xf32>
    %282 = math.rsqrt %281 : vector<16x1xf32>
    %283 = vector.broadcast %282 : vector<16x1xf32> to vector<16x32xf32>
    %284 = arith.mulf %274, %283 : vector<16x32xf32>
    %285 = vector.broadcast %267 : vector<1x32xf32> to vector<16x32xf32>
    %286 = arith.mulf %284, %285 : vector<16x32xf32>
    %287 = vector.broadcast %268 : vector<1x32xf32> to vector<16x32xf32>
    %288 = arith.addf %286, %287 : vector<16x32xf32>
    %c0_104 = arith.constant 0 : index
    %c0_105 = arith.constant 0 : index
    %289 = vector.load %arg5[%c0_104, %c0_105] : memref<32x128xbf16, #tpu.memory_space<vmem>>, vector<32x128xbf16>
    %290 = arith.truncf %288 : vector<16x32xf32> to vector<16x32xbf16>
    %cst_106 = arith.constant dense<0.000000e+00> : vector<16x128xf32>
    %291 = tpu.matmul %290, %289, %cst_106 {dimension_numbers = #tpu.dot_dimension_numbers<[1], [0], [0], [1], [0, 0, 1, 1], [], []>} : vector<16x32xbf16>, vector<32x128xbf16>, vector<16x128xf32> -> vector<16x128xf32>
    %c18 = arith.constant 18 : index
    %c0_107 = arith.constant 0 : index
    %292 = vector.load %arg6[%c18, %c0_107] : memref<19x128xf32, #tpu.memory_space<vmem>>, vector<1x128xf32>
    %293 = vector.broadcast %292 : vector<1x128xf32> to vector<16x128xf32>
    %294 = arith.addf %291, %293 : vector<16x128xf32>
    %cst_108 = arith.constant dense<0xFF800000> : vector<16xf32>
    %295 = vector.multi_reduction <maximumf>, %294, %cst_108 [1] : vector<16x128xf32> to vector<16xf32>
    %296 = vector.shape_cast %295 : vector<16xf32> to vector<16x1xf32>
    %297 = vector.broadcast %296 : vector<16x1xf32> to vector<16x128xf32>
    %298 = arith.subf %294, %297 : vector<16x128xf32>
    %299 = math.exp %298 : vector<16x128xf32>
    %cst_109 = arith.constant dense<0.000000e+00> : vector<16xf32>
    %300 = vector.multi_reduction <add>, %299, %cst_109 [1] : vector<16x128xf32> to vector<16xf32>
    %301 = vector.shape_cast %300 : vector<16xf32> to vector<16x1xf32>
    %302 = vector.broadcast %296 : vector<16x1xf32> to vector<16x128xf32>
    %303 = arith.subf %294, %302 : vector<16x128xf32>
    %304 = math.log %301 : vector<16x1xf32>
    %305 = vector.broadcast %304 : vector<16x1xf32> to vector<16x128xf32>
    %306 = arith.subf %303, %305 : vector<16x128xf32>
    %307 = math.exp %306 : vector<16x128xf32>
    %c0_110 = arith.constant 0 : index
    %c0_111 = arith.constant 0 : index
    %308 = vector.load %arg7[%c0_110, %c0_111] : memref<16x128xf32, #tpu.memory_space<vmem>>, vector<16x128xf32>
    tpu.vector_store %arg7[%c0_110, %c0_111], %307 {strides = array<i32>} : memref<16x128xf32, #tpu.memory_space<vmem>>, vector<16x128xf32>,
    return
  }
}

</mosaic_0001>

<llo_original>
// kernel: tpu_custom_call.1
$region0: #{tpu_custom_call.1}
  #allocation0 [shape = 'u32[]', space=smem, size = 0x4, offset = 0x4, fixed_abs, tag = 'smem constant byte address 0x4 - core index']
  #allocation1 [shape = 'u32[144,128]{1,0:T(1,128)}', space=vmem, size = 0x12000, scoped, tag = 'internal scratch']
  %s0 = inlined_call_operand.hbm [shape: f32[16,32], index: 0, kind: input, shape index: {}]
  %s1 = inlined_call_operand.vmem [shape: bf16[2,32,96], index: 1, kind: input, shape index: {}]
  %s2 = inlined_call_operand.vmem [shape: bf16[2,32,32], index: 2, kind: input, shape index: {}]
  %s3 = inlined_call_operand.vmem [shape: bf16[2,32,64], index: 3, kind: input, shape index: {}]
  %s4 = inlined_call_operand.vmem [shape: bf16[2,64,32], index: 4, kind: input, shape index: {}]
  %s5 = inlined_call_operand.vmem [shape: bf16[32,128], index: 5, kind: input, shape index: {}]
  %s6 = inlined_call_operand.hbm [shape: f32[19,128], index: 6, kind: input, shape index: {}]
  %s7 = inlined_call_operand.hbm [shape: f32[16,128], index: 7, kind: output, shape index: {}]
  %s8 = sld [smem:[#allocation0]]
  $region46: #{tpu_custom_call.1} parent=0
    _
  %s10 = ssub.s32 1, %s8
  %s11 = scalar_select 0, %s10, %s8
  $region1: #{tpu_custom_call.1} parent=0
    #allocation2 [shape = 'u8[8192]{0}', space=vmem, size = 0x2000, scoped, tag = 'input window, operand 0, single buffered']
    #allocation3 [shape = 's32[1]{0}', space=sflag, size = 0x4, scoped, tag = 'scoped memory for tpu_custom_call.1']
    #allocation4 [shape = 's32[1]{0}', space=sflag, size = 0x4, scoped, tag = 'scoped memory for tpu_custom_call.1']
    #allocation5 [shape = 'u8[12288]{0}', space=vmem, size = 0x3000, scoped, tag = 'input window, operand 6, single buffered']
    #allocation6 [shape = 's32[1]{0}', space=sflag, size = 0x4, scoped, tag = 'scoped memory for tpu_custom_call.1']
    #allocation7 [shape = 'u8[8192]{0}', space=vmem, size = 0x2000, scoped, tag = 'output window, operand 0, single buffered']
    %12 = vsyncpa [#allocation3], 0
    %13 = vsyncpa [#allocation6], 0
    %14 = vsyncpa [#allocation4], 0
    // Predicated region
    $region2: #{tpu_custom_call.1} parent=1 // pred_check
      _
    $region3: #{tpu_custom_call.1} parent=1 // pred_check_branch
      %16 = sbr.rel (0) target = $region5
    $region4: #{tpu_custom_call.1} parent=1 // pred_region
      %s18 = ssub.s32 256, 256
      %19 = vsyncadd [#allocation3], %s18
      %s20 = sshll.u32 [#allocation2], 4
      %s21 = int_to_ptr.vmem [resolvable:$true] %s20
      %26 = dma.hbm_to_vmem [thread:$0]  %s0, 256, %s21, [#allocation3], 128, 128, 8
    $region5: #{tpu_custom_call.1} parent=1 // pred_fallthru
      _
    // Predicated region
    $region6: #{tpu_custom_call.1} parent=1 // pred_check
      _
    $region7: #{tpu_custom_call.1} parent=1 // pred_check_branch
      %28 = sbr.rel (0) target = $region9
    $region8: #{tpu_custom_call.1} parent=1 // pred_region
      _
    $region9: #{tpu_custom_call.1} parent=1 // pred_fallthru
      _
    // Predicated region
    $region10: #{tpu_custom_call.1} parent=1 // pred_check
      _
    $region11: #{tpu_custom_call.1} parent=1 // pred_check_branch
      %30 = sbr.rel (0) target = $region13
    $region12: #{tpu_custom_call.1} parent=1 // pred_region
      _
    $region13: #{tpu_custom_call.1} parent=1 // pred_fallthru
      _
    // Predicated region
    $region14: #{tpu_custom_call.1} parent=1 // pred_check
      _
    $region15: #{tpu_custom_call.1} parent=1 // pred_check_branch
      %32 = sbr.rel (0) target = $region17
    $region16: #{tpu_custom_call.1} parent=1 // pred_region
      _
    $region17: #{tpu_custom_call.1} parent=1 // pred_fallthru
      _
    // Predicated region
    $region18: #{tpu_custom_call.1} parent=1 // pred_check
      _
    $region19: #{tpu_custom_call.1} parent=1 // pred_check_branch
      %34 = sbr.rel (0) target = $region21
    $region20: #{tpu_custom_call.1} parent=1 // pred_region
      _
    $region21: #{tpu_custom_call.1} parent=1 // pred_fallthru
      _
    // Predicated region
    $region22: #{tpu_custom_call.1} parent=1 // pred_check
      _
    $region23: #{tpu_custom_call.1} parent=1 // pred_check_branch
      %36 = sbr.rel (0) target = $region25
    $region24: #{tpu_custom_call.1} parent=1 // pred_region
      _
    $region25: #{tpu_custom_call.1} parent=1 // pred_fallthru
      _
    // Predicated region
    $region26: #{tpu_custom_call.1} parent=1 // pred_check
      _
    $region27: #{tpu_custom_call.1} parent=1 // pred_check_branch
      %38 = sbr.rel (0) target = $region29
    $region28: #{tpu_custom_call.1} parent=1 // pred_region
      %s40 = ssub.s32 384, 384
      %41 = vsyncadd [#allocation6], %s40
      %s42 = sshll.u32 [#allocation5], 4
      %s43 = int_to_ptr.vmem [resolvable:$true] %s42
      %48 = dma.hbm_to_vmem [thread:$0]  %s6, 384, %s43, [#allocation6], 128, 128, 8
    $region29: #{tpu_custom_call.1} parent=1 // pred_fallthru
      _
    // Predicated region
    $region30: #{tpu_custom_call.1} parent=1 // pred_check
      _
    $region31: #{tpu_custom_call.1} parent=1 // pred_check_branch
      %50 = sbr.rel (0) target = $region33
    $region32: #{tpu_custom_call.1} parent=1 // pred_region
      %51 = dma.done [#allocation3], 256
    $region33: #{tpu_custom_call.1} parent=1 // pred_fallthru
      _
    // Predicated region
    $region34: #{tpu_custom_call.1} parent=1 // pred_check
      _
    $region35: #{tpu_custom_call.1} parent=1 // pred_check_branch
      %53 = sbr.rel (0) target = $region37
    $region36: #{tpu_custom_call.1} parent=1 // pred_region
      %54 = dma.done [#allocation6], 384
    $region37: #{tpu_custom_call.1} parent=1 // pred_fallthru
      _
    %v56 = vld [vmem:[#allocation2] sm:$0xff]
    %v57 = vld [vmem:[#allocation2 + $0x8] sm:$0xff]
    %v58 = vld [vmem:[#allocation5] sm:$0x1]
    %v59 = vld [vmem:[#allocation5 + $0x1] sm:$0x1]
    %vm60 = vcmask 261120
    %v61 = vsel %vm60, %v56, 0.0
    %62 = vadd.xlane.f32.xlu0 %v61
    %v63 = vpop.xlane.xlu0 %62
    %v64 = vsel %vm60, %v57, 0.0
    %65 = vadd.xlane.f32.xlu0 %v64
    %v66 = vpop.xlane.xlu0 %65
    %v67 = vrcp.pop 32.0
    %v68 = vmul.f32 %v63, %v67
    %v69 = vmul.f32 %v66, %v67
    %v70 = vsub.f32 %v56, %v68
    %v71 = vsub.f32 %v57, %v69
    %v72 = vmul.f32 %v70, %v70
    %v73 = vmul.f32 %v71, %v71
    %v74 = vsel %vm60, %v72, 0.0
    %75 = vadd.xlane.f32.xlu0 %v74
    %v76 = vpop.xlane.xlu0 %75
    %v77 = vsel %vm60, %v73, 0.0
    %78 = vadd.xlane.f32.xlu0 %v77
    %v79 = vpop.xlane.xlu0 %78
    %v80 = vmul.f32 %v76, %v67
    %v81 = vmul.f32 %v79, %v67
    %v82 = vadd.f32 %v80, 1e-12
    %v83 = vadd.f32 %v81, 1e-12
    %v84 = vrsqrt.pop %v82
    %v85 = vrsqrt.pop %v83
    %v86 = vmul.f32 %v70, %v84
    %v87 = vmul.f32 %v71, %v85
    %v88 = vlaneseq
    %v89 = vshrl.u32 %v88, 7
    %v90 = vsub.s32 0, %v89
    %v91 = vrot.slane %v58, %v90
    %v92 = vmul.f32 %v86, %v91
    %v93 = vmul.f32 %v87, %v91
    %v94 = vlaneseq
    %v95 = vshrl.u32 %v94, 7
    %v96 = vsub.s32 0, %v95
    %v97 = vrot.slane %v59, %v96
    %v98 = vadd.f32 %v92, %v97
    %v99 = vadd.f32 %v93, %v97
    %v100 = vld [vmem:[%s1] sm:$0xf]
    %v101 = vld [vmem:[%s1 + $0x4] sm:$0xf]
    %v102 = vld [vmem:[%s1 + $0x8] sm:$0xf]
    %v103 = vld [vmem:[%s1 + $0xc] sm:$0xf]
    %v104 = vpack.c.bf16 %v99, %v98
    %v105 = vld [vmem:[#allocation5 + $0x2] sm:$0x1]
    %v106 = vlaneseq
    %v107 = vshrl.u32 %v106, 7
    %v108 = vsub.s32 0, %v107
    %v109 = vrot.slane %v105, %v108
    %v114 = vunpack.c.l.b16 %v100
    %v115 = vunpack.c.l.b16 %v101
    %v116 = vunpack.c.l.b16 %v102
    %v117 = vunpack.c.l.b16 %v103
    %v118 = vpack.c.b16 %v115, %v114
    %v119 = vpack.c.b16 %v117, %v116
    %v123 = vsel %vm60, %v104, 0
    %125 = vmatprep.subr.bf16.mxu0 0
    %126 = vmatpush1.bf16.msra.mxu0 %v118
    %127 = vmatprep.subr.bf16.mxu0 0
    %128 = vmatpush1.bf16.msra.mxu0 %v119
    %129 = vmatprep.subr.bf16.mxu0 0
    %130 = vmatpush1.bf16.msra.mxu0 0
    %131 = vmatprep.subr.bf16.mxu0 0
    %132 = vmatpush1.bf16.msra.mxu0 0
    %133 = vmatprep.subr.bf16.mxu0 0
    %134 = vmatpush1.bf16.msra.mxu0 0
    %135 = vmatprep.subr.bf16.mxu0 0
    %136 = vmatpush1.bf16.msra.mxu0 0
    %137 = vmatprep.subr.bf16.mxu0 0
    %138 = vmatpush1.bf16.msra.mxu0 0
    %139 = vmatprep.subr.bf16.mxu0 0
    %140 = vmatpush1.bf16.msra.mxu0 0
    %141 = vmatprep.subr.bf16.mxu0 0
    %142 = vmatpush1.bf16.msra.mxu0 0
    %143 = vmatprep.subr.bf16.mxu0 0
    %144 = vmatpush1.bf16.msra.mxu0 0
    %145 = vmatprep.subr.bf16.mxu0 0
    %146 = vmatpush1.bf16.msra.mxu0 0
    %147 = vmatprep.subr.bf16.mxu0 0
    %148 = vmatpush1.bf16.msra.mxu0 0
    %149 = vmatprep.subr.bf16.mxu0 0
    %150 = vmatpush1.bf16.msra.mxu0 0
    %151 = vmatprep.subr.bf16.mxu0 0
    %152 = vmatpush1.bf16.msra.mxu0 0
    %153 = vmatprep.subr.bf16.mxu0 0
    %154 = vmatpush1.bf16.msra.mxu0 0
    %155 = vmatprep.subr.bf16.mxu0 0
    %156 = vmatpush1.bf16.msra.mxu0 0
    %157 = vmatprep.mubr.bf16.mxu0 0
    %158 = vmatmul.mubr.bf16.gmra.mrb[0].mxu0 %v123
    %v159 = vpop.f32.mrb[0].mxu0
    %v160 = vadd.f32 %v109, %v159
    %v161 = vpop.f32.mrb[0].mxu0
    %v162 = vpop.f32.mrb[0].mxu0
    %v163 = vadd.f32 %v109, %v162
    %v164 = vpop.f32.mrb[0].mxu0
    %165 = vdwg.mxu0
    %v166 = vpack.c.bf16 %v163, %v160
    %v168 = vunpack.c.l.b16 %v166
    %v169 = vunpack.c.h.b16 %v166
    %v170 = vpack.c.b16 %v168, %v168
    %v171 = vpack.c.b16 %v169, %v169
    %172 = vrot.lane.b32.xlu0 %v170, 96
    %v173 = vpop.permute.xlu0 %172
    %vm174 = vcmask 130048
    %v176 = vsel %vm174, %v170, 0
    %v179 = vsel %vm174, %v173, 0
    %181 = vmatprep.subr.bf16.mxu0 0
    %182 = vmatpush1.bf16.xpose.msra.mxu0 %v179
    %183 = vmatprep.subr.bf16.mxu0 0
    %184 = vmatpush1.bf16.xpose.msra.mxu0 0
    %185 = vmatprep.subr.bf16.mxu0 0
    %186 = vmatpush1.bf16.xpose.msra.mxu0 0
    %187 = vmatprep.subr.bf16.mxu0 0
    %188 = vmatpush1.bf16.xpose.msra.mxu0 0
    %189 = vmatprep.subr.bf16.mxu0 0
    %190 = vmatpush1.bf16.xpose.msra.mxu0 0
    %191 = vmatprep.subr.bf16.mxu0 0
    %192 = vmatpush1.bf16.xpose.msra.mxu0 0
    %193 = vmatprep.subr.bf16.mxu0 0
    %194 = vmatpush1.bf16.xpose.msra.mxu0 0
    %195 = vmatprep.subr.bf16.mxu0 0
    %196 = vmatpush1.bf16.xpose.msra.mxu0 0
    %197 = vmatprep.subr.bf16.mxu0 0
    %198 = vmatpush1.bf16.xpose.msra.mxu0 0
    %199 = vmatprep.subr.bf16.mxu0 0
    %200 = vmatpush1.bf16.xpose.msra.mxu0 0
    %201 = vmatprep.subr.bf16.mxu0 0
    %202 = vmatpush1.bf16.xpose.msra.mxu0 0
    %203 = vmatprep.subr.bf16.mxu0 0
    %204 = vmatpush1.bf16.xpose.msra.mxu0 0
    %205 = vmatprep.subr.bf16.mxu0 0
    %206 = vmatpush1.bf16.xpose.msra.mxu0 0
    %207 = vmatprep.subr.bf16.mxu0 0
    %208 = vmatpush1.bf16.xpose.msra.mxu0 0
    %209 = vmatprep.subr.bf16.mxu0 0
    %210 = vmatpush1.bf16.xpose.msra.mxu0 0
    %211 = vmatprep.subr.bf16.mxu0 0
    %212 = vmatpush1.bf16.xpose.msra.mxu0 0
    %213 = vmatprep.mubr.bf16.mxu0 0
    %214 = vmatmul.mubr.bf16.gmra.mrb[0].mxu0 %v176
    %v215 = vpop.f32.mrb[0].mxu0
    %v216 = vadd.f32 0.0, %v215
    %v217 = vpop.f32.mrb[0].mxu0
    %v218 = vpop.f32.mrb[0].mxu0
    %v219 = vpop.f32.mrb[0].mxu0
    %220 = vdwg.mxu0
    %221 = vrot.lane.b32.xlu0 %v171, 96
    %v222 = vpop.permute.xlu0 %221
    %v224 = vsel %vm174, %v171, 0
    %v227 = vsel %vm174, %v222, 0
    %229 = vmatprep.subr.bf16.mxu0 0
    %230 = vmatpush1.bf16.xpose.msra.mxu0 %v227
    %231 = vmatprep.subr.bf16.mxu0 0
    %232 = vmatpush1.bf16.xpose.msra.mxu0 0
    %233 = vmatprep.subr.bf16.mxu0 0
    %234 = vmatpush1.bf16.xpose.msra.mxu0 0
    %235 = vmatprep.subr.bf16.mxu0 0
    %236 = vmatpush1.bf16.xpose.msra.mxu0 0
    %237 = vmatprep.subr.bf16.mxu0 0
    %238 = vmatpush1.bf16.xpose.msra.mxu0 0
    %239 = vmatprep.subr.bf16.mxu0 0
    %240 = vmatpush1.bf16.xpose.msra.mxu0 0
    %241 = vmatprep.subr.bf16.mxu0 0
    %242 = vmatpush1.bf16.xpose.msra.mxu0 0
    %243 = vmatprep.subr.bf16.mxu0 0
    %244 = vmatpush1.bf16.xpose.msra.mxu0 0
    %245 = vmatprep.subr.bf16.mxu0 0
    %246 = vmatpush1.bf16.xpose.msra.mxu0 0
    %247 = vmatprep.subr.bf16.mxu0 0
    %248 = vmatpush1.bf16.xpose.msra.mxu0 0
    %249 = vmatprep.subr.bf16.mxu0 0
    %250 = vmatpush1.bf16.xpose.msra.mxu0 0
    %251 = vmatprep.subr.bf16.mxu0 0
    %252 = vmatpush1.bf16.xpose.msra.mxu0 0
    %253 = vmatprep.subr.bf16.mxu0 0
    %254 = vmatpush1.bf16.xpose.msra.mxu0 0
    %255 = vmatprep.subr.bf16.mxu0 0
    %256 = vmatpush1.bf16.xpose.msra.mxu0 0
    %257 = vmatprep.subr.bf16.mxu0 0
    %258 = vmatpush1.bf16.xpose.msra.mxu0 0
    %259 = vmatprep.subr.bf16.mxu0 0
    %260 = vmatpush1.bf16.xpose.msra.mxu0 0
    %261 = vmatprep.mubr.bf16.mxu0 0
    %262 = vmatmul.mubr.bf16.gmra.mrb[0].mxu0 %v224
    %v263 = vpop.f32.mrb[0].mxu0
    %v264 = vadd.f32 0.0, %v263
    %v265 = vpop.f32.mrb[0].mxu0
    %v266 = vpop.f32.mrb[0].mxu0
    %v267 = vpop.f32.mrb[0].mxu0
    %268 = vdwg.mxu0
    %v269 = vmul.f32 %v216, 0.25
    %v270 = vmul.f32 %v264, 0.25
    %vm271 = vcmask 64512
    %v272 = vsel %vm271, %v269, -inf
    %273 = vmax.xlane.f32.xlu0 %v272
    %v274 = vpop.xlane.xlu0 %273
    %v275 = vsel %vm271, %v270, -inf
    %276 = vmax.xlane.f32.xlu0 %v275
    %v277 = vpop.xlane.xlu0 %276
    %v278 = vsub.f32 %v269, %v274
    %v279 = vsub.f32 %v270, %v277
    %v280 = vmul.f32 %v278, 1.442695
    %v281 = vpow.pop %v280
    %v282 = vmul.f32 %v279, 1.442695
    %v283 = vpow.pop %v282
    %v284 = vsel %vm271, %v281, 0.0
    %285 = vadd.xlane.f32.xlu0 %v284
    %v286 = vpop.xlane.xlu0 %285
    %v287 = vsel %vm271, %v283, 0.0
    %288 = vadd.xlane.f32.xlu0 %v287
    %v289 = vpop.xlane.xlu0 %288
    %v290 = vrcp.pop %v286
    %v291 = vrcp.pop %v289
    %v292 = vmul.f32 %v281, %v290
    %v293 = vmul.f32 %v283, %v291
    %v294 = vpack.c.bf16 %v292, %v292
    %v295 = vpack.c.bf16 %v293, %v293
    %296 = vrot.lane.b32.xlu0 %v170, 64
    %v297 = vpop.permute.xlu0 %296
    %v299 = vsel %vm271, %v294, 0
    %vm301 = vcmask 1043456
    %v303 = vsel %vm301, %v297, 0
    %305 = vmatprep.subr.bf16.mxu0 0
    %306 = vmatpush1.bf16.msra.mxu0 %v303
    %307 = vmatprep.subr.bf16.mxu0 0
    %308 = vmatpush1.bf16.msra.mxu0 0
    %309 = vmatprep.subr.bf16.mxu0 0
    %310 = vmatpush1.bf16.msra.mxu0 0
    %311 = vmatprep.subr.bf16.mxu0 0
    %312 = vmatpush1.bf16.msra.mxu0 0
    %313 = vmatprep.subr.bf16.mxu0 0
    %314 = vmatpush1.bf16.msra.mxu0 0
    %315 = vmatprep.subr.bf16.mxu0 0
    %316 = vmatpush1.bf16.msra.mxu0 0
    %317 = vmatprep.subr.bf16.mxu0 0
    %318 = vmatpush1.bf16.msra.mxu0 0
    %319 = vmatprep.subr.bf16.mxu0 0
    %320 = vmatpush1.bf16.msra.mxu0 0
    %321 = vmatprep.subr.bf16.mxu0 0
    %322 = vmatpush1.bf16.msra.mxu0 0
    %323 = vmatprep.subr.bf16.mxu0 0
    %324 = vmatpush1.bf16.msra.mxu0 0
    %325 = vmatprep.subr.bf16.mxu0 0
    %326 = vmatpush1.bf16.msra.mxu0 0
    %327 = vmatprep.subr.bf16.mxu0 0
    %328 = vmatpush1.bf16.msra.mxu0 0
    %329 = vmatprep.subr.bf16.mxu0 0
    %330 = vmatpush1.bf16.msra.mxu0 0
    %331 = vmatprep.subr.bf16.mxu0 0
    %332 = vmatpush1.bf16.msra.mxu0 0
    %333 = vmatprep.subr.bf16.mxu0 0
    %334 = vmatpush1.bf16.msra.mxu0 0
    %335 = vmatprep.subr.bf16.mxu0 0
    %336 = vmatpush1.bf16.msra.mxu0 0
    %337 = vmatprep.mubr.bf16.mxu0 0
    %338 = vmatmul.mubr.bf16.gmra.mrb[0].mxu0 %v299
    %v339 = vpop.f32.mrb[0].mxu0
    %v340 = vadd.f32 0.0, %v339
    %v341 = vpop.f32.mrb[0].mxu0
    %v342 = vpop.f32.mrb[0].mxu0
    %v343 = vpop.f32.mrb[0].mxu0
    %344 = vdwg.mxu0
    %345 = vrot.lane.b32.xlu0 %v171, 64
    %v346 = vpop.permute.xlu0 %345
    %v348 = vsel %vm271, %v295, 0
    %v351 = vsel %vm301, %v346, 0
    %353 = vmatprep.subr.bf16.mxu0 0
    %354 = vmatpush1.bf16.msra.mxu0 %v351
    %355 = vmatprep.subr.bf16.mxu0 0
    %356 = vmatpush1.bf16.msra.mxu0 0
    %357 = vmatprep.subr.bf16.mxu0 0
    %358 = vmatpush1.bf16.msra.mxu0 0
    %359 = vmatprep.subr.bf16.mxu0 0
    %360 = vmatpush1.bf16.msra.mxu0 0
    %361 = vmatprep.subr.bf16.mxu0 0
    %362 = vmatpush1.bf16.msra.mxu0 0
    %363 = vmatprep.subr.bf16.mxu0 0
    %364 = vmatpush1.bf16.msra.mxu0 0
    %365 = vmatprep.subr.bf16.mxu0 0
    %366 = vmatpush1.bf16.msra.mxu0 0
    %367 = vmatprep.subr.bf16.mxu0 0
    %368 = vmatpush1.bf16.msra.mxu0 0
    %369 = vmatprep.subr.bf16.mxu0 0
    %370 = vmatpush1.bf16.msra.mxu0 0
    %371 = vmatprep.subr.bf16.mxu0 0
    %372 = vmatpush1.bf16.msra.mxu0 0
    %373 = vmatprep.subr.bf16.mxu0 0
    %374 = vmatpush1.bf16.msra.mxu0 0
    %375 = vmatprep.subr.bf16.mxu0 0
    %376 = vmatpush1.bf16.msra.mxu0 0
    %377 = vmatprep.subr.bf16.mxu0 0
    %378 = vmatpush1.bf16.msra.mxu0 0
    %379 = vmatprep.subr.bf16.mxu0 0
    %380 = vmatpush1.bf16.msra.mxu0 0
    %381 = vmatprep.subr.bf16.mxu0 0
    %382 = vmatpush1.bf16.msra.mxu0 0
    %383 = vmatprep.subr.bf16.mxu0 0
    %384 = vmatpush1.bf16.msra.mxu0 0
    %385 = vmatprep.mubr.bf16.mxu0 0
    %386 = vmatmul.mubr.bf16.gmra.mrb[0].mxu0 %v348
    %v387 = vpop.f32.mrb[0].mxu0
    %v388 = vadd.f32 0.0, %v387
    %v389 = vpop.f32.mrb[0].mxu0
    %v390 = vpop.f32.mrb[0].mxu0
    %v391 = vpop.f32.mrb[0].mxu0
    %392 = vdwg.mxu0
    %393 = vrot.lane.b32.xlu0 %v170, 112
    %v394 = vpop.permute.xlu0 %393
    %395 = vrot.lane.b32.xlu0 %v170, 80
    %v396 = vpop.permute.xlu0 %395
    %v398 = vsel %vm174, %v394, 0
    %v401 = vsel %vm174, %v396, 0
    %403 = vmatprep.subr.bf16.mxu0 0
    %404 = vmatpush1.bf16.xpose.msra.mxu0 %v401
    %405 = vmatprep.subr.bf16.mxu0 0
    %406 = vmatpush1.bf16.xpose.msra.mxu0 0
    %407 = vmatprep.subr.bf16.mxu0 0
    %408 = vmatpush1.bf16.xpose.msra.mxu0 0
    %409 = vmatprep.subr.bf16.mxu0 0
    %410 = vmatpush1.bf16.xpose.msra.mxu0 0
    %411 = vmatprep.subr.bf16.mxu0 0
    %412 = vmatpush1.bf16.xpose.msra.mxu0 0
    %413 = vmatprep.subr.bf16.mxu0 0
    %414 = vmatpush1.bf16.xpose.msra.mxu0 0
    %415 = vmatprep.subr.bf16.mxu0 0
    %416 = vmatpush1.bf16.xpose.msra.mxu0 0
    %417 = vmatprep.subr.bf16.mxu0 0
    %418 = vmatpush1.bf16.xpose.msra.mxu0 0
    %419 = vmatprep.subr.bf16.mxu0 0
    %420 = vmatpush1.bf16.xpose.msra.mxu0 0
    %421 = vmatprep.subr.bf16.mxu0 0
    %422 = vmatpush1.bf16.xpose.msra.mxu0 0
    %423 = vmatprep.subr.bf16.mxu0 0
    %424 = vmatpush1.bf16.xpose.msra.mxu0 0
    %425 = vmatprep.subr.bf16.mxu0 0
    %426 = vmatpush1.bf16.xpose.msra.mxu0 0
    %427 = vmatprep.subr.bf16.mxu0 0
    %428 = vmatpush1.bf16.xpose.msra.mxu0 0
    %429 = vmatprep.subr.bf16.mxu0 0
    %430 = vmatpush1.bf16.xpose.msra.mxu0 0
    %431 = vmatprep.subr.bf16.mxu0 0
    %432 = vmatpush1.bf16.xpose.msra.mxu0 0
    %433 = vmatprep.subr.bf16.mxu0 0
    %434 = vmatpush1.bf16.xpose.msra.mxu0 0
    %435 = vmatprep.mubr.bf16.mxu0 0
    %436 = vmatmul.mubr.bf16.gmra.mrb[0].mxu0 %v398
    %v437 = vpop.f32.mrb[0].mxu0
    %v438 = vadd.f32 0.0, %v437
    %v439 = vpop.f32.mrb[0].mxu0
    %v440 = vpop.f32.mrb[0].mxu0
    %v441 = vpop.f32.mrb[0].mxu0
    %442 = vdwg.mxu0
    %443 = vrot.lane.b32.xlu0 %v171, 112
    %v444 = vpop.permute.xlu0 %443
    %445 = vrot.lane.b32.xlu0 %v171, 80
    %v446 = vpop.permute.xlu0 %445
    %v448 = vsel %vm174, %v444, 0
    %v451 = vsel %vm174, %v446, 0
    %453 = vmatprep.subr.bf16.mxu0 0
    %454 = vmatpush1.bf16.xpose.msra.mxu0 %v451
    %455 = vmatprep.subr.bf16.mxu0 0
    %456 = vmatpush1.bf16.xpose.msra.mxu0 0
    %457 = vmatprep.subr.bf16.mxu0 0
    %458 = vmatpush1.bf16.xpose.msra.mxu0 0
    %459 = vmatprep.subr.bf16.mxu0 0
    %460 = vmatpush1.bf16.xpose.msra.mxu0 0
    %461 = vmatprep.subr.bf16.mxu0 0
    %462 = vmatpush1.bf16.xpose.msra.mxu0 0
    %463 = vmatprep.subr.bf16.mxu0 0
    %464 = vmatpush1.bf16.xpose.msra.mxu0 0
    %465 = vmatprep.subr.bf16.mxu0 0
    %466 = vmatpush1.bf16.xpose.msra.mxu0 0
    %467 = vmatprep.subr.bf16.mxu0 0
    %468 = vmatpush1.bf16.xpose.msra.mxu0 0
    %469 = vmatprep.subr.bf16.mxu0 0
    %470 = vmatpush1.bf16.xpose.msra.mxu0 0
    %471 = vmatprep.subr.bf16.mxu0 0
    %472 = vmatpush1.bf16.xpose.msra.mxu0 0
    %473 = vmatprep.subr.bf16.mxu0 0
    %474 = vmatpush1.bf16.xpose.msra.mxu0 0
    %475 = vmatprep.subr.bf16.mxu0 0
    %476 = vmatpush1.bf16.xpose.msra.mxu0 0
    %477 = vmatprep.subr.bf16.mxu0 0
    %478 = vmatpush1.bf16.xpose.msra.mxu0 0
    %479 = vmatprep.subr.bf16.mxu0 0
    %480 = vmatpush1.bf16.xpose.msra.mxu0 0
    %481 = vmatprep.subr.bf16.mxu0 0
    %482 = vmatpush1.bf16.xpose.msra.mxu0 0
    %483 = vmatprep.subr.bf16.mxu0 0
    %484 = vmatpush1.bf16.xpose.msra.mxu0 0
    %485 = vmatprep.mubr.bf16.mxu0 0
    %486 = vmatmul.mubr.bf16.gmra.mrb[0].mxu0 %v448
    %v487 = vpop.f32.mrb[0].mxu0
    %v488 = vadd.f32 0.0, %v487
    %v489 = vpop.f32.mrb[0].mxu0
    %v490 = vpop.f32.mrb[0].mxu0
    %v491 = vpop.f32.mrb[0].mxu0
    %492 = vdwg.mxu0
    %v493 = vmul.f32 %v438, 0.25
    %v494 = vmul.f32 %v488, 0.25
    %v495 = vsel %vm271, %v493, -inf
    %496 = vmax.xlane.f32.xlu0 %v495
    %v497 = vpop.xlane.xlu0 %496
    %v498 = vsel %vm271, %v494, -inf
    %499 = vmax.xlane.f32.xlu0 %v498
    %v500 = vpop.xlane.xlu0 %499
    %v501 = vsub.f32 %v493, %v497
    %v502 = vsub.f32 %v494, %v500
    %v503 = vmul.f32 %v501, 1.442695
    %v504 = vpow.pop %v503
    %v505 = vmul.f32 %v502, 1.442695
    %v506 = vpow.pop %v505
    %v507 = vsel %vm271, %v504, 0.0
    %508 = vadd.xlane.f32.xlu0 %v507
    %v509 = vpop.xlane.xlu0 %508
    %v510 = vsel %vm271, %v506, 0.0
    %511 = vadd.xlane.f32.xlu0 %v510
    %v512 = vpop.xlane.xlu0 %511
    %v513 = vrcp.pop %v509
    %v514 = vrcp.pop %v512
    %v515 = vmul.f32 %v504, %v513
    %v516 = vmul.f32 %v506, %v514
    %v517 = vpack.c.bf16 %v515, %v515
    %v518 = vpack.c.bf16 %v516, %v516
    %519 = vrot.lane.b32.xlu0 %v170, 48
    %v520 = vpop.permute.xlu0 %519
    %v522 = vsel %vm271, %v517, 0
    %v525 = vsel %vm301, %v520, 0
    %527 = vmatprep.subr.bf16.mxu0 0
    %528 = vmatpush1.bf16.msra.mxu0 %v525
    %529 = vmatprep.subr.bf16.mxu0 0
    %530 = vmatpush1.bf16.msra.mxu0 0
    %531 = vmatprep.subr.bf16.mxu0 0
    %532 = vmatpush1.bf16.msra.mxu0 0
    %533 = vmatprep.subr.bf16.mxu0 0
    %534 = vmatpush1.bf16.msra.mxu0 0
    %535 = vmatprep.subr.bf16.mxu0 0
    %536 = vmatpush1.bf16.msra.mxu0 0
    %537 = vmatprep.subr.bf16.mxu0 0
    %538 = vmatpush1.bf16.msra.mxu0 0
    %539 = vmatprep.subr.bf16.mxu0 0
    %540 = vmatpush1.bf16.msra.mxu0 0
    %541 = vmatprep.subr.bf16.mxu0 0
    %542 = vmatpush1.bf16.msra.mxu0 0
    %543 = vmatprep.subr.bf16.mxu0 0
    %544 = vmatpush1.bf16.msra.mxu0 0
    %545 = vmatprep.subr.bf16.mxu0 0
    %546 = vmatpush1.bf16.msra.mxu0 0
    %547 = vmatprep.subr.bf16.mxu0 0
    %548 = vmatpush1.bf16.msra.mxu0 0
    %549 = vmatprep.subr.bf16.mxu0 0
    %550 = vmatpush1.bf16.msra.mxu0 0
    %551 = vmatprep.subr.bf16.mxu0 0
    %552 = vmatpush1.bf16.msra.mxu0 0
    %553 = vmatprep.subr.bf16.mxu0 0
    %554 = vmatpush1.bf16.msra.mxu0 0
    %555 = vmatprep.subr.bf16.mxu0 0
    %556 = vmatpush1.bf16.msra.mxu0 0
    %557 = vmatprep.subr.bf16.mxu0 0
    %558 = vmatpush1.bf16.msra.mxu0 0
    %559 = vmatprep.mubr.bf16.mxu0 0
    %560 = vmatmul.mubr.bf16.gmra.mrb[0].mxu0 %v522
    %v561 = vpop.f32.mrb[0].mxu0
    %v562 = vadd.f32 0.0, %v561
    %v563 = vpop.f32.mrb[0].mxu0
    %v564 = vpop.f32.mrb[0].mxu0
    %v565 = vpop.f32.mrb[0].mxu0
    %566 = vdwg.mxu0
    %567 = vrot.lane.b32.xlu0 %v171, 48
    %v568 = vpop.permute.xlu0 %567
    %v570 = vsel %vm271, %v518, 0
    %v573 = vsel %vm301, %v568, 0
    %575 = vmatprep.subr.bf16.mxu0 0
    %576 = vmatpush1.bf16.msra.mxu0 %v573
    %577 = vmatprep.subr.bf16.mxu0 0
    %578 = vmatpush1.bf16.msra.mxu0 0
    %579 = vmatprep.subr.bf16.mxu0 0
    %580 = vmatpush1.bf16.msra.mxu0 0
    %581 = vmatprep.subr.bf16.mxu0 0
    %582 = vmatpush1.bf16.msra.mxu0 0
    %583 = vmatprep.subr.bf16.mxu0 0
    %584 = vmatpush1.bf16.msra.mxu0 0
    %585 = vmatprep.subr.bf16.mxu0 0
    %586 = vmatpush1.bf16.msra.mxu0 0
    %587 = vmatprep.subr.bf16.mxu0 0
    %588 = vmatpush1.bf16.msra.mxu0 0
    %589 = vmatprep.subr.bf16.mxu0 0
    %590 = vmatpush1.bf16.msra.mxu0 0
    %591 = vmatprep.subr.bf16.mxu0 0
    %592 = vmatpush1.bf16.msra.mxu0 0
    %593 = vmatprep.subr.bf16.mxu0 0
    %594 = vmatpush1.bf16.msra.mxu0 0
    %595 = vmatprep.subr.bf16.mxu0 0
    %596 = vmatpush1.bf16.msra.mxu0 0
    %597 = vmatprep.subr.bf16.mxu0 0
    %598 = vmatpush1.bf16.msra.mxu0 0
    %599 = vmatprep.subr.bf16.mxu0 0
    %600 = vmatpush1.bf16.msra.mxu0 0
    %601 = vmatprep.subr.bf16.mxu0 0
    %602 = vmatpush1.bf16.msra.mxu0 0
    %603 = vmatprep.subr.bf16.mxu0 0
    %604 = vmatpush1.bf16.msra.mxu0 0
    %605 = vmatprep.subr.bf16.mxu0 0
    %606 = vmatpush1.bf16.msra.mxu0 0
    %607 = vmatprep.mubr.bf16.mxu0 0
    %608 = vmatmul.mubr.bf16.gmra.mrb[0].mxu0 %v570
    %v609 = vpop.f32.mrb[0].mxu0
    %v610 = vadd.f32 0.0, %v609
    %v611 = vpop.f32.mrb[0].mxu0
    %v612 = vpop.f32.mrb[0].mxu0
    %v613 = vpop.f32.mrb[0].mxu0
    %614 = vdwg.mxu0
    %617 = vrot.lane.b32.xlu0 %v562, 16
    %v618 = vpop.permute.xlu0 %617
    %619 = vrot.lane.b32.xlu0 %v610, 16
    %v620 = vpop.permute.xlu0 %619
    %v623 = vsel %vm174, %v340, %v618
    %v624 = vsel %vm174, %v388, %v620
    %v625 = vld [vmem:[%s2] sm:$0xf]
    %v626 = vld [vmem:[%s2 + $0x4] sm:$0xf]
    %v627 = vld [vmem:[%s2 + $0x8] sm:$0xf]
    %v628 = vld [vmem:[%s2 + $0xc] sm:$0xf]
    %v629 = vpack.c.bf16 %v624, %v623
    %v630 = vld [vmem:[#allocation5 + $0x3] sm:$0x1]
    %v631 = vlaneseq
    %v632 = vshrl.u32 %v631, 7
    %v633 = vsub.s32 0, %v632
    %v634 = vrot.slane %v630, %v633
    %v639 = vunpack.c.l.b16 %v625
    %v640 = vunpack.c.l.b16 %v626
    %v641 = vunpack.c.l.b16 %v627
    %v642 = vunpack.c.l.b16 %v628
    %v643 = vpack.c.b16 %v640, %v639
    %v644 = vpack.c.b16 %v642, %v641
    %v648 = vsel %vm60, %v629, 0
    %650 = vmatprep.subr.bf16.mxu0 0
    %651 = vmatpush1.bf16.msra.mxu0 %v643
    %652 = vmatprep.subr.bf16.mxu0 0
    %653 = vmatpush1.bf16.msra.mxu0 %v644
    %654 = vmatprep.subr.bf16.mxu0 0
    %655 = vmatpush1.bf16.msra.mxu0 0
    %656 = vmatprep.subr.bf16.mxu0 0
    %657 = vmatpush1.bf16.msra.mxu0 0
    %658 = vmatprep.subr.bf16.mxu0 0
    %659 = vmatpush1.bf16.msra.mxu0 0
    %660 = vmatprep.subr.bf16.mxu0 0
    %661 = vmatpush1.bf16.msra.mxu0 0
    %662 = vmatprep.subr.bf16.mxu0 0
    %663 = vmatpush1.bf16.msra.mxu0 0
    %664 = vmatprep.subr.bf16.mxu0 0
    %665 = vmatpush1.bf16.msra.mxu0 0
    %666 = vmatprep.subr.bf16.mxu0 0
    %667 = vmatpush1.bf16.msra.mxu0 0
    %668 = vmatprep.subr.bf16.mxu0 0
    %669 = vmatpush1.bf16.msra.mxu0 0
    %670 = vmatprep.subr.bf16.mxu0 0
    %671 = vmatpush1.bf16.msra.mxu0 0
    %672 = vmatprep.subr.bf16.mxu0 0
    %673 = vmatpush1.bf16.msra.mxu0 0
    %674 = vmatprep.subr.bf16.mxu0 0
    %675 = vmatpush1.bf16.msra.mxu0 0
    %676 = vmatprep.subr.bf16.mxu0 0
    %677 = vmatpush1.bf16.msra.mxu0 0
    %678 = vmatprep.subr.bf16.mxu0 0
    %679 = vmatpush1.bf16.msra.mxu0 0
    %680 = vmatprep.subr.bf16.mxu0 0
    %681 = vmatpush1.bf16.msra.mxu0 0
    %682 = vmatprep.mubr.bf16.mxu0 0
    %683 = vmatmul.mubr.bf16.gmra.mrb[0].mxu0 %v648
    %v684 = vpop.f32.mrb[0].mxu0
    %v685 = vadd.f32 %v634, %v684
    %v686 = vpop.f32.mrb[0].mxu0
    %v687 = vpop.f32.mrb[0].mxu0
    %v688 = vadd.f32 %v634, %v687
    %v689 = vpop.f32.mrb[0].mxu0
    %690 = vdwg.mxu0
    %v691 = vadd.f32 %v685, %v98
    %v692 = vadd.f32 %v688, %v99
    %v693 = vld [vmem:[#allocation5 + $0x4] sm:$0x1]
    %v694 = vld [vmem:[#allocation5 + $0x5] sm:$0x1]
    %v695 = vsel %vm60, %v691, 0.0
    %696 = vadd.xlane.f32.xlu0 %v695
    %v697 = vpop.xlane.xlu0 %696
    %v698 = vsel %vm60, %v692, 0.0
    %699 = vadd.xlane.f32.xlu0 %v698
    %v700 = vpop.xlane.xlu0 %699
    %v701 = vmul.f32 %v697, %v67
    %v702 = vmul.f32 %v700, %v67
    %v703 = vsub.f32 %v691, %v701
    %v704 = vsub.f32 %v692, %v702
    %v705 = vmul.f32 %v703, %v703
    %v706 = vmul.f32 %v704, %v704
    %v707 = vsel %vm60, %v705, 0.0
    %708 = vadd.xlane.f32.xlu0 %v707
    %v709 = vpop.xlane.xlu0 %708
    %v710 = vsel %vm60, %v706, 0.0
    %711 = vadd.xlane.f32.xlu0 %v710
    %v712 = vpop.xlane.xlu0 %711
    %v713 = vmul.f32 %v709, %v67
    %v714 = vmul.f32 %v712, %v67
    %v715 = vadd.f32 %v713, 1e-12
    %v716 = vadd.f32 %v714, 1e-12
    %v717 = vrsqrt.pop %v715
    %v718 = vrsqrt.pop %v716
    %v719 = vmul.f32 %v703, %v717
    %v720 = vmul.f32 %v704, %v718
    %v721 = vlaneseq
    %v722 = vshrl.u32 %v721, 7
    %v723 = vsub.s32 0, %v722
    %v724 = vrot.slane %v693, %v723
    %v725 = vmul.f32 %v719, %v724
    %v726 = vmul.f32 %v720, %v724
    %v727 = vlaneseq
    %v728 = vshrl.u32 %v727, 7
    %v729 = vsub.s32 0, %v728
    %v730 = vrot.slane %v694, %v729
    %v731 = vadd.f32 %v725, %v730
    %v732 = vadd.f32 %v726, %v730
    %v733 = vld [vmem:[%s3] sm:$0xf]
    %v734 = vld [vmem:[%s3 + $0x4] sm:$0xf]
    %v735 = vld [vmem:[%s3 + $0x8] sm:$0xf]
    %v736 = vld [vmem:[%s3 + $0xc] sm:$0xf]
    %v737 = vpack.c.bf16 %v732, %v731
    %v738 = vld [vmem:[#allocation5 + $0x6] sm:$0x1]
    %v739 = vlaneseq
    %v740 = vshrl.u32 %v739, 7
    %v741 = vsub.s32 0, %v740
    %v742 = vrot.slane %v738, %v741
    %v747 = vunpack.c.l.b16 %v733
    %v748 = vunpack.c.l.b16 %v734
    %v749 = vunpack.c.l.b16 %v735
    %v750 = vunpack.c.l.b16 %v736
    %v751 = vpack.c.b16 %v748, %v747
    %v752 = vpack.c.b16 %v750, %v749
    %v756 = vsel %vm60, %v737, 0
    %758 = vmatprep.subr.bf16.mxu0 0
    %759 = vmatpush1.bf16.msra.mxu0 %v751
    %760 = vmatprep.subr.bf16.mxu0 0
    %761 = vmatpush1.bf16.msra.mxu0 %v752
    %762 = vmatprep.subr.bf16.mxu0 0
    %763 = vmatpush1.bf16.msra.mxu0 0
    %764 = vmatprep.subr.bf16.mxu0 0
    %765 = vmatpush1.bf16.msra.mxu0 0
    %766 = vmatprep.subr.bf16.mxu0 0
    %767 = vmatpush1.bf16.msra.mxu0 0
    %768 = vmatprep.subr.bf16.mxu0 0
    %769 = vmatpush1.bf16.msra.mxu0 0
    %770 = vmatprep.subr.bf16.mxu0 0
    %771 = vmatpush1.bf16.msra.mxu0 0
    %772 = vmatprep.subr.bf16.mxu0 0
    %773 = vmatpush1.bf16.msra.mxu0 0
    %774 = vmatprep.subr.bf16.mxu0 0
    %775 = vmatpush1.bf16.msra.mxu0 0
    %776 = vmatprep.subr.bf16.mxu0 0
    %777 = vmatpush1.bf16.msra.mxu0 0
    %778 = vmatprep.subr.bf16.mxu0 0
    %779 = vmatpush1.bf16.msra.mxu0 0
    %780 = vmatprep.subr.bf16.mxu0 0
    %781 = vmatpush1.bf16.msra.mxu0 0
    %782 = vmatprep.subr.bf16.mxu0 0
    %783 = vmatpush1.bf16.msra.mxu0 0
    %784 = vmatprep.subr.bf16.mxu0 0
    %785 = vmatpush1.bf16.msra.mxu0 0
    %786 = vmatprep.subr.bf16.mxu0 0
    %787 = vmatpush1.bf16.msra.mxu0 0
    %788 = vmatprep.subr.bf16.mxu0 0
    %789 = vmatpush1.bf16.msra.mxu0 0
    %790 = vmatprep.mubr.bf16.mxu0 0
    %791 = vmatmul.mubr.bf16.gmra.mrb[0].mxu0 %v756
    %v792 = vpop.f32.mrb[0].mxu0
    %v793 = vadd.f32 %v742, %v792
    %v794 = vpop.f32.mrb[0].mxu0
    %v795 = vpop.f32.mrb[0].mxu0
    %v796 = vadd.f32 %v742, %v795
    %v797 = vpop.f32.mrb[0].mxu0
    %798 = vdwg.mxu0
    %v799 = vmul.f32 %v793, 0.5
    %v800 = vmul.f32 %v796, 0.5
    %v801 = vmul.f32 %v793, 0.044715
    %v802 = vmul.f32 %v796, 0.044715
    %v803 = vmul.f32 %v801, %v793
    %v804 = vmul.f32 %v802, %v796
    %v805 = vmul.f32 %v803, %v793
    %v806 = vmul.f32 %v804, %v796
    %v807 = vadd.f32 %v793, %v805
    %v808 = vadd.f32 %v796, %v806
    %v809 = vmul.f32 %v807, 0.7978846
    %v810 = vmul.f32 %v808, 0.7978846
    %v811 = vtanh.pop %v809
    %v812 = vtanh.pop %v810
    %v813 = vadd.f32 %v811, 1.0
    %v814 = vadd.f32 %v812, 1.0
    %v815 = vmul.f32 %v799, %v813
    %v816 = vmul.f32 %v800, %v814
    %v817 = vld [vmem:[%s4] sm:$0xf]
    %v818 = vld [vmem:[%s4 + $0x4] sm:$0xf]
    %v819 = vld [vmem:[%s4 + $0x8] sm:$0xf]
    %v820 = vld [vmem:[%s4 + $0xc] sm:$0xf]
    %v821 = vld [vmem:[%s4 + $0x10] sm:$0xf]
    %v822 = vld [vmem:[%s4 + $0x14] sm:$0xf]
    %v823 = vld [vmem:[%s4 + $0x18] sm:$0xf]
    %v824 = vld [vmem:[%s4 + $0x1c] sm:$0xf]
    %v825 = vpack.c.bf16 %v816, %v815
    %v826 = vld [vmem:[#allocation5 + $0x7] sm:$0x1]
    %v827 = vlaneseq
    %v828 = vshrl.u32 %v827, 7
    %v829 = vsub.s32 0, %v828
    %v830 = vrot.slane %v826, %v829
    %v839 = vunpack.c.l.b16 %v817
    %v840 = vunpack.c.l.b16 %v818
    %v841 = vunpack.c.l.b16 %v819
    %v842 = vunpack.c.l.b16 %v820
    %v843 = vunpack.c.l.b16 %v821
    %v844 = vunpack.c.l.b16 %v822
    %v845 = vunpack.c.l.b16 %v823
    %v846 = vunpack.c.l.b16 %v824
    %v847 = vpack.c.b16 %v840, %v839
    %v848 = vpack.c.b16 %v842, %v841
    %v849 = vpack.c.b16 %v844, %v843
    %v850 = vpack.c.b16 %v846, %v845
    %vm855 = vcmask 523264
    %v857 = vsel %vm855, %v825, 0
    %859 = vmatprep.subr.bf16.mxu0 0
    %860 = vmatpush1.bf16.msra.mxu0 %v847
    %861 = vmatprep.subr.bf16.mxu0 0
    %862 = vmatpush1.bf16.msra.mxu0 %v848
    %863 = vmatprep.subr.bf16.mxu0 0
    %864 = vmatpush1.bf16.msra.mxu0 %v849
    %865 = vmatprep.subr.bf16.mxu0 0
    %866 = vmatpush1.bf16.msra.mxu0 %v850
    %867 = vmatprep.subr.bf16.mxu0 0
    %868 = vmatpush1.bf16.msra.mxu0 0
    %869 = vmatprep.subr.bf16.mxu0 0
    %870 = vmatpush1.bf16.msra.mxu0 0
    %871 = vmatprep.subr.bf16.mxu0 0
    %872 = vmatpush1.bf16.msra.mxu0 0
    %873 = vmatprep.subr.bf16.mxu0 0
    %874 = vmatpush1.bf16.msra.mxu0 0
    %875 = vmatprep.subr.bf16.mxu0 0
    %876 = vmatpush1.bf16.msra.mxu0 0
    %877 = vmatprep.subr.bf16.mxu0 0
    %878 = vmatpush1.bf16.msra.mxu0 0
    %879 = vmatprep.subr.bf16.mxu0 0
    %880 = vmatpush1.bf16.msra.mxu0 0
    %881 = vmatprep.subr.bf16.mxu0 0
    %882 = vmatpush1.bf16.msra.mxu0 0
    %883 = vmatprep.subr.bf16.mxu0 0
    %884 = vmatpush1.bf16.msra.mxu0 0
    %885 = vmatprep.subr.bf16.mxu0 0
    %886 = vmatpush1.bf16.msra.mxu0 0
    %887 = vmatprep.subr.bf16.mxu0 0
    %888 = vmatpush1.bf16.msra.mxu0 0
    %889 = vmatprep.subr.bf16.mxu0 0
    %890 = vmatpush1.bf16.msra.mxu0 0
    %891 = vmatprep.mubr.bf16.mxu0 0
    %892 = vmatmul.mubr.bf16.gmra.mrb[0].mxu0 %v857
    %v893 = vpop.f32.mrb[0].mxu0
    %v894 = vadd.f32 %v830, %v893
    %v895 = vpop.f32.mrb[0].mxu0
    %v896 = vpop.f32.mrb[0].mxu0
    %v897 = vadd.f32 %v830, %v896
    %v898 = vpop.f32.mrb[0].mxu0
    %899 = vdwg.mxu0
    %v900 = vadd.f32 %v894, %v731
    %v901 = vadd.f32 %v897, %v732
    %v902 = vld [vmem:[#allocation5 + $0x8] sm:$0x1]
    %v903 = vld [vmem:[#allocation5 + $0x9] sm:$0x1]
    %v904 = vsel %vm60, %v900, 0.0
    %905 = vadd.xlane.f32.xlu0 %v904
    %v906 = vpop.xlane.xlu0 %905
    %v907 = vsel %vm60, %v901, 0.0
    %908 = vadd.xlane.f32.xlu0 %v907
    %v909 = vpop.xlane.xlu0 %908
    %v910 = vmul.f32 %v906, %v67
    %v911 = vmul.f32 %v909, %v67
    %v912 = vsub.f32 %v900, %v910
    %v913 = vsub.f32 %v901, %v911
    %v914 = vmul.f32 %v912, %v912
    %v915 = vmul.f32 %v913, %v913
    %v916 = vsel %vm60, %v914, 0.0
    %917 = vadd.xlane.f32.xlu0 %v916
    %v918 = vpop.xlane.xlu0 %917
    %v919 = vsel %vm60, %v915, 0.0
    %920 = vadd.xlane.f32.xlu0 %v919
    %v921 = vpop.xlane.xlu0 %920
    %v922 = vmul.f32 %v918, %v67
    %v923 = vmul.f32 %v921, %v67
    %v924 = vadd.f32 %v922, 1e-12
    %v925 = vadd.f32 %v923, 1e-12
    %v926 = vrsqrt.pop %v924
    %v927 = vrsqrt.pop %v925
    %v928 = vmul.f32 %v912, %v926
    %v929 = vmul.f32 %v913, %v927
    %v930 = vlaneseq
    %v931 = vshrl.u32 %v930, 7
    %v932 = vsub.s32 0, %v931
    %v933 = vrot.slane %v902, %v932
    %v934 = vmul.f32 %v928, %v933
    %v935 = vmul.f32 %v929, %v933
    %v936 = vlaneseq
    %v937 = vshrl.u32 %v936, 7
    %v938 = vsub.s32 0, %v937
    %v939 = vrot.slane %v903, %v938
    %v940 = vadd.f32 %v934, %v939
    %v941 = vadd.f32 %v935, %v939
    %s942 = scalar_lea.vmem %s1, 16
    %v943 = vld [vmem:[%s942] sm:$0xf]
    %v944 = vld [vmem:[%s942 + $0x4] sm:$0xf]
    %v945 = vld [vmem:[%s942 + $0x8] sm:$0xf]
    %v946 = vld [vmem:[%s942 + $0xc] sm:$0xf]
    %v947 = vpack.c.bf16 %v941, %v940
    %v948 = vld [vmem:[#allocation5 + $0xa] sm:$0x1]
    %v949 = vlaneseq
    %v950 = vshrl.u32 %v949, 7
    %v951 = vsub.s32 0, %v950
    %v952 = vrot.slane %v948, %v951
    %v957 = vunpack.c.l.b16 %v943
    %v958 = vunpack.c.l.b16 %v944
    %v959 = vunpack.c.l.b16 %v945
    %v960 = vunpack.c.l.b16 %v946
    %v961 = vpack.c.b16 %v958, %v957
    %v962 = vpack.c.b16 %v960, %v959
    %v966 = vsel %vm60, %v947, 0
    %968 = vmatprep.subr.bf16.mxu0 0
    %969 = vmatpush1.bf16.msra.mxu0 %v961
    %970 = vmatprep.subr.bf16.mxu0 0
    %971 = vmatpush1.bf16.msra.mxu0 %v962
    %972 = vmatprep.subr.bf16.mxu0 0
    %973 = vmatpush1.bf16.msra.mxu0 0
    %974 = vmatprep.subr.bf16.mxu0 0
    %975 = vmatpush1.bf16.msra.mxu0 0
    %976 = vmatprep.subr.bf16.mxu0 0
    %977 = vmatpush1.bf16.msra.mxu0 0
    %978 = vmatprep.subr.bf16.mxu0 0
    %979 = vmatpush1.bf16.msra.mxu0 0
    %980 = vmatprep.subr.bf16.mxu0 0
    %981 = vmatpush1.bf16.msra.mxu0 0
    %982 = vmatprep.subr.bf16.mxu0 0
    %983 = vmatpush1.bf16.msra.mxu0 0
    %984 = vmatprep.subr.bf16.mxu0 0
    %985 = vmatpush1.bf16.msra.mxu0 0
    %986 = vmatprep.subr.bf16.mxu0 0
    %987 = vmatpush1.bf16.msra.mxu0 0
    %988 = vmatprep.subr.bf16.mxu0 0
    %989 = vmatpush1.bf16.msra.mxu0 0
    %990 = vmatprep.subr.bf16.mxu0 0
    %991 = vmatpush1.bf16.msra.mxu0 0
    %992 = vmatprep.subr.bf16.mxu0 0
    %993 = vmatpush1.bf16.msra.mxu0 0
    %994 = vmatprep.subr.bf16.mxu0 0
    %995 = vmatpush1.bf16.msra.mxu0 0
    %996 = vmatprep.subr.bf16.mxu0 0
    %997 = vmatpush1.bf16.msra.mxu0 0
    %998 = vmatprep.subr.bf16.mxu0 0
    %999 = vmatpush1.bf16.msra.mxu0 0
    %1000 = vmatprep.mubr.bf16.mxu0 0
    %1001 = vmatmul.mubr.bf16.gmra.mrb[0].mxu0 %v966
    %v1002 = vpop.f32.mrb[0].mxu0
    %v1003 = vadd.f32 %v952, %v1002
    %v1004 = vpop.f32.mrb[0].mxu0
    %v1005 = vpop.f32.mrb[0].mxu0
    %v1006 = vadd.f32 %v952, %v1005
    %v1007 = vpop.f32.mrb[0].mxu0
    %1008 = vdwg.mxu0
    %v1009 = vpack.c.bf16 %v1006, %v1003
    %v1011 = vunpack.c.l.b16 %v1009
    %v1012 = vunpack.c.h.b16 %v1009
    %v1013 = vpack.c.b16 %v1011, %v1011
    %v1014 = vpack.c.b16 %v1012, %v1012
    %1015 = vrot.lane.b32.xlu0 %v1013, 96
    %v1016 = vpop.permute.xlu0 %1015
    %v1018 = vsel %vm174, %v1013, 0
    %v1021 = vsel %vm174, %v1016, 0
    %1023 = vmatprep.subr.bf16.mxu0 0
    %1024 = vmatpush1.bf16.xpose.msra.mxu0 %v1021
    %1025 = vmatprep.subr.bf16.mxu0 0
    %1026 = vmatpush1.bf16.xpose.msra.mxu0 0
    %1027 = vmatprep.subr.bf16.mxu0 0
    %1028 = vmatpush1.bf16.xpose.msra.mxu0 0
    %1029 = vmatprep.subr.bf16.mxu0 0
    %1030 = vmatpush1.bf16.xpose.msra.mxu0 0
    %1031 = vmatprep.subr.bf16.mxu0 0
    %1032 = vmatpush1.bf16.xpose.msra.mxu0 0
    %1033 = vmatprep.subr.bf16.mxu0 0
    %1034 = vmatpush1.bf16.xpose.msra.mxu0 0
    %1035 = vmatprep.subr.bf16.mxu0 0
    %1036 = vmatpush1.bf16.xpose.msra.mxu0 0
    %1037 = vmatprep.subr.bf16.mxu0 0
    %1038 = vmatpush1.bf16.xpose.msra.mxu0 0
    %1039 = vmatprep.subr.bf16.mxu0 0
    %1040 = vmatpush1.bf16.xpose.msra.mxu0 0
    %1041 = vmatprep.subr.bf16.mxu0 0
    %1042 = vmatpush1.bf16.xpose.msra.mxu0 0
    %1043 = vmatprep.subr.bf16.mxu0 0
    %1044 = vmatpush1.bf16.xpose.msra.mxu0 0
    %1045 = vmatprep.subr.bf16.mxu0 0
    %1046 = vmatpush1.bf16.xpose.msra.mxu0 0
    %1047 = vmatprep.subr.bf16.mxu0 0
    %1048 = vmatpush1.bf16.xpose.msra.mxu0 0
    %1049 = vmatprep.subr.bf16.mxu0 0
    %1050 = vmatpush1.bf16.xpose.msra.mxu0 0
    %1051 = vmatprep.subr.bf16.mxu0 0
    %1052 = vmatpush1.bf16.xpose.msra.mxu0 0
    %1053 = vmatprep.subr.bf16.mxu0 0
    %1054 = vmatpush1.bf16.xpose.msra.mxu0 0
    %1055 = vmatprep.mubr.bf16.mxu0 0
    %1056 = vmatmul.mubr.bf16.gmra.mrb[0].mxu0 %v1018
    %v1057 = vpop.f32.mrb[0].mxu0
    %v1058 = vadd.f32 0.0, %v1057
    %v1059 = vpop.f32.mrb[0].mxu0
    %v1060 = vpop.f32.mrb[0].mxu0
    %v1061 = vpop.f32.mrb[0].mxu0
    %1062 = vdwg.mxu0
    %1063 = vrot.lane.b32.xlu0 %v1014, 96
    %v1064 = vpop.permute.xlu0 %1063
    %v1066 = vsel %vm174, %v1014, 0
    %v1069 = vsel %vm174, %v1064, 0
    %1071 = vmatprep.subr.bf16.mxu0 0
    %1072 = vmatpush1.bf16.xpose.msra.mxu0 %v1069
    %1073 = vmatprep.subr.bf16.mxu0 0
    %1074 = vmatpush1.bf16.xpose.msra.mxu0 0
    %1075 = vmatprep.subr.bf16.mxu0 0
    %1076 = vmatpush1.bf16.xpose.msra.mxu0 0
    %1077 = vmatprep.subr.bf16.mxu0 0
    %1078 = vmatpush1.bf16.xpose.msra.mxu0 0
    %1079 = vmatprep.subr.bf16.mxu0 0
    %1080 = vmatpush1.bf16.xpose.msra.mxu0 0
    %1081 = vmatprep.subr.bf16.mxu0 0
    %1082 = vmatpush1.bf16.xpose.msra.mxu0 0
    %1083 = vmatprep.subr.bf16.mxu0 0
    %1084 = vmatpush1.bf16.xpose.msra.mxu0 0
    %1085 = vmatprep.subr.bf16.mxu0 0
    %1086 = vmatpush1.bf16.xpose.msra.mxu0 0
    %1087 = vmatprep.subr.bf16.mxu0 0
    %1088 = vmatpush1.bf16.xpose.msra.mxu0 0
    %1089 = vmatprep.subr.bf16.mxu0 0
    %1090 = vmatpush1.bf16.xpose.msra.mxu0 0
    %1091 = vmatprep.subr.bf16.mxu0 0
    %1092 = vmatpush1.bf16.xpose.msra.mxu0 0
    %1093 = vmatprep.subr.bf16.mxu0 0
    %1094 = vmatpush1.bf16.xpose.msra.mxu0 0
    %1095 = vmatprep.subr.bf16.mxu0 0
    %1096 = vmatpush1.bf16.xpose.msra.mxu0 0
    %1097 = vmatprep.subr.bf16.mxu0 0
    %1098 = vmatpush1.bf16.xpose.msra.mxu0 0
    %1099 = vmatprep.subr.bf16.mxu0 0
    %1100 = vmatpush1.bf16.xpose.msra.mxu0 0
    %1101 = vmatprep.subr.bf16.mxu0 0
    %1102 = vmatpush1.bf16.xpose.msra.mxu0 0
    %1103 = vmatprep.mubr.bf16.mxu0 0
    %1104 = vmatmul.mubr.bf16.gmra.mrb[0].mxu0 %v1066
    %v1105 = vpop.f32.mrb[0].mxu0
    %v1106 = vadd.f32 0.0, %v1105
    %v1107 = vpop.f32.mrb[0].mxu0
    %v1108 = vpop.f32.mrb[0].mxu0
    %v1109 = vpop.f32.mrb[0].mxu0
    %1110 = vdwg.mxu0
    %v1111 = vmul.f32 %v1058, 0.25
    %v1112 = vmul.f32 %v1106, 0.25
    %v1113 = vsel %vm271, %v1111, -inf
    %1114 = vmax.xlane.f32.xlu0 %v1113
    %v1115 = vpop.xlane.xlu0 %1114
    %v1116 = vsel %vm271, %v1112, -inf
    %1117 = vmax.xlane.f32.xlu0 %v1116
    %v1118 = vpop.xlane.xlu0 %1117
    %v1119 = vsub.f32 %v1111, %v1115
    %v1120 = vsub.f32 %v1112, %v1118
    %v1121 = vmul.f32 %v1119, 1.442695
    %v1122 = vpow.pop %v1121
    %v1123 = vmul.f32 %v1120, 1.442695
    %v1124 = vpow.pop %v1123
    %v1125 = vsel %vm271, %v1122, 0.0
    %1126 = vadd.xlane.f32.xlu0 %v1125
    %v1127 = vpop.xlane.xlu0 %1126
    %v1128 = vsel %vm271, %v1124, 0.0
    %1129 = vadd.xlane.f32.xlu0 %v1128
    %v1130 = vpop.xlane.xlu0 %1129
    %v1131 = vrcp.pop %v1127
    %v1132 = vrcp.pop %v1130
    %v1133 = vmul.f32 %v1122, %v1131
    %v1134 = vmul.f32 %v1124, %v1132
    %v1135 = vpack.c.bf16 %v1133, %v1133
    %v1136 = vpack.c.bf16 %v1134, %v1134
    %1137 = vrot.lane.b32.xlu0 %v1013, 64
    %v1138 = vpop.permute.xlu0 %1137
    %v1140 = vsel %vm271, %v1135, 0
    %v1143 = vsel %vm301, %v1138, 0
    %1145 = vmatprep.subr.bf16.mxu0 0
    %1146 = vmatpush1.bf16.msra.mxu0 %v1143
    %1147 = vmatprep.subr.bf16.mxu0 0
    %1148 = vmatpush1.bf16.msra.mxu0 0
    %1149 = vmatprep.subr.bf16.mxu0 0
    %1150 = vmatpush1.bf16.msra.mxu0 0
    %1151 = vmatprep.subr.bf16.mxu0 0
    %1152 = vmatpush1.bf16.msra.mxu0 0
    %1153 = vmatprep.subr.bf16.mxu0 0
    %1154 = vmatpush1.bf16.msra.mxu0 0
    %1155 = vmatprep.subr.bf16.mxu0 0
    %1156 = vmatpush1.bf16.msra.mxu0 0
    %1157 = vmatprep.subr.bf16.mxu0 0
    %1158 = vmatpush1.bf16.msra.mxu0 0
    %1159 = vmatprep.subr.bf16.mxu0 0
    %1160 = vmatpush1.bf16.msra.mxu0 0
    %1161 = vmatprep.subr.bf16.mxu0 0
    %1162 = vmatpush1.bf16.msra.mxu0 0
    %1163 = vmatprep.subr.bf16.mxu0 0
    %1164 = vmatpush1.bf16.msra.mxu0 0
    %1165 = vmatprep.subr.bf16.mxu0 0
    %1166 = vmatpush1.bf16.msra.mxu0 0
    %1167 = vmatprep.subr.bf16.mxu0 0
    %1168 = vmatpush1.bf16.msra.mxu0 0
    %1169 = vmatprep.subr.bf16.mxu0 0
    %1170 = vmatpush1.bf16.msra.mxu0 0
    %1171 = vmatprep.subr.bf16.mxu0 0
    %1172 = vmatpush1.bf16.msra.mxu0 0
    %1173 = vmatprep.subr.bf16.mxu0 0
    %1174 = vmatpush1.bf16.msra.mxu0 0
    %1175 = vmatprep.subr.bf16.mxu0 0
    %1176 = vmatpush1.bf16.msra.mxu0 0
    %1177 = vmatprep.mubr.bf16.mxu0 0
    %1178 = vmatmul.mubr.bf16.gmra.mrb[0].mxu0 %v1140
    %v1179 = vpop.f32.mrb[0].mxu0
    %v1180 = vadd.f32 0.0, %v1179
    %v1181 = vpop.f32.mrb[0].mxu0
    %v1182 = vpop.f32.mrb[0].mxu0
    %v1183 = vpop.f32.mrb[0].mxu0
    %1184 = vdwg.mxu0
    %1185 = vrot.lane.b32.xlu0 %v1014, 64
    %v1186 = vpop.permute.xlu0 %1185
    %v1188 = vsel %vm271, %v1136, 0
    %v1191 = vsel %vm301, %v1186, 0
    %1193 = vmatprep.subr.bf16.mxu0 0
    %1194 = vmatpush1.bf16.msra.mxu0 %v1191
    %1195 = vmatprep.subr.bf16.mxu0 0
    %1196 = vmatpush1.bf16.msra.mxu0 0
    %1197 = vmatprep.subr.bf16.mxu0 0
    %1198 = vmatpush1.bf16.msra.mxu0 0
    %1199 = vmatprep.subr.bf16.mxu0 0
    %1200 = vmatpush1.bf16.msra.mxu0 0
    %1201 = vmatprep.subr.bf16.mxu0 0
    %1202 = vmatpush1.bf16.msra.mxu0 0
    %1203 = vmatprep.subr.bf16.mxu0 0
    %1204 = vmatpush1.bf16.msra.mxu0 0
    %1205 = vmatprep.subr.bf16.mxu0 0
    %1206 = vmatpush1.bf16.msra.mxu0 0
    %1207 = vmatprep.subr.bf16.mxu0 0
    %1208 = vmatpush1.bf16.msra.mxu0 0
    %1209 = vmatprep.subr.bf16.mxu0 0
    %1210 = vmatpush1.bf16.msra.mxu0 0
    %1211 = vmatprep.subr.bf16.mxu0 0
    %1212 = vmatpush1.bf16.msra.mxu0 0
    %1213 = vmatprep.subr.bf16.mxu0 0
    %1214 = vmatpush1.bf16.msra.mxu0 0
    %1215 = vmatprep.subr.bf16.mxu0 0
    %1216 = vmatpush1.bf16.msra.mxu0 0
    %1217 = vmatprep.subr.bf16.mxu0 0
    %1218 = vmatpush1.bf16.msra.mxu0 0
    %1219 = vmatprep.subr.bf16.mxu0 0
    %1220 = vmatpush1.bf16.msra.mxu0 0
    %1221 = vmatprep.subr.bf16.mxu0 0
    %1222 = vmatpush1.bf16.msra.mxu0 0
    %1223 = vmatprep.subr.bf16.mxu0 0
    %1224 = vmatpush1.bf16.msra.mxu0 0
    %1225 = vmatprep.mubr.bf16.mxu0 0
    %1226 = vmatmul.mubr.bf16.gmra.mrb[0].mxu0 %v1188
    %v1227 = vpop.f32.mrb[0].mxu0
    %v1228 = vadd.f32 0.0, %v1227
    %v1229 = vpop.f32.mrb[0].mxu0
    %v1230 = vpop.f32.mrb[0].mxu0
    %v1231 = vpop.f32.mrb[0].mxu0
    %1232 = vdwg.mxu0
    %1233 = vrot.lane.b32.xlu0 %v1013, 112
    %v1234 = vpop.permute.xlu0 %1233
    %1235 = vrot.lane.b32.xlu0 %v1013, 80
    %v1236 = vpop.permute.xlu0 %1235
    %v1238 = vsel %vm174, %v1234, 0
    %v1241 = vsel %vm174, %v1236, 0
    %1243 = vmatprep.subr.bf16.mxu0 0
    %1244 = vmatpush1.bf16.xpose.msra.mxu0 %v1241
    %1245 = vmatprep.subr.bf16.mxu0 0
    %1246 = vmatpush1.bf16.xpose.msra.mxu0 0
    %1247 = vmatprep.subr.bf16.mxu0 0
    %1248 = vmatpush1.bf16.xpose.msra.mxu0 0
    %1249 = vmatprep.subr.bf16.mxu0 0
    %1250 = vmatpush1.bf16.xpose.msra.mxu0 0
    %1251 = vmatprep.subr.bf16.mxu0 0
    %1252 = vmatpush1.bf16.xpose.msra.mxu0 0
    %1253 = vmatprep.subr.bf16.mxu0 0
    %1254 = vmatpush1.bf16.xpose.msra.mxu0 0
    %1255 = vmatprep.subr.bf16.mxu0 0
    %1256 = vmatpush1.bf16.xpose.msra.mxu0 0
    %1257 = vmatprep.subr.bf16.mxu0 0
    %1258 = vmatpush1.bf16.xpose.msra.mxu0 0
    %1259 = vmatprep.subr.bf16.mxu0 0
    %1260 = vmatpush1.bf16.xpose.msra.mxu0 0
    %1261 = vmatprep.subr.bf16.mxu0 0
    %1262 = vmatpush1.bf16.xpose.msra.mxu0 0
    %1263 = vmatprep.subr.bf16.mxu0 0
    %1264 = vmatpush1.bf16.xpose.msra.mxu0 0
    %1265 = vmatprep.subr.bf16.mxu0 0
    %1266 = vmatpush1.bf16.xpose.msra.mxu0 0
    %1267 = vmatprep.subr.bf16.mxu0 0
    %1268 = vmatpush1.bf16.xpose.msra.mxu0 0
    %1269 = vmatprep.subr.bf16.mxu0 0
    %1270 = vmatpush1.bf16.xpose.msra.mxu0 0
    %1271 = vmatprep.subr.bf16.mxu0 0
    %1272 = vmatpush1.bf16.xpose.msra.mxu0 0
    %1273 = vmatprep.subr.bf16.mxu0 0
    %1274 = vmatpush1.bf16.xpose.msra.mxu0 0
    %1275 = vmatprep.mubr.bf16.mxu0 0
    %1276 = vmatmul.mubr.bf16.gmra.mrb[0].mxu0 %v1238
    %v1277 = vpop.f32.mrb[0].mxu0
    %v1278 = vadd.f32 0.0, %v1277
    %v1279 = vpop.f32.mrb[0].mxu0
    %v1280 = vpop.f32.mrb[0].mxu0
    %v1281 = vpop.f32.mrb[0].mxu0
    %1282 = vdwg.mxu0
    %1283 = vrot.lane.b32.xlu0 %v1014, 112
    %v1284 = vpop.permute.xlu0 %1283
    %1285 = vrot.lane.b32.xlu0 %v1014, 80
    %v1286 = vpop.permute.xlu0 %1285
    %v1288 = vsel %vm174, %v1284, 0
    %v1291 = vsel %vm174, %v1286, 0
    %1293 = vmatprep.subr.bf16.mxu0 0
    %1294 = vmatpush1.bf16.xpose.msra.mxu0 %v1291
    %1295 = vmatprep.subr.bf16.mxu0 0
    %1296 = vmatpush1.bf16.xpose.msra.mxu0 0
    %1297 = vmatprep.subr.bf16.mxu0 0
    %1298 = vmatpush1.bf16.xpose.msra.mxu0 0
    %1299 = vmatprep.subr.bf16.mxu0 0
    %1300 = vmatpush1.bf16.xpose.msra.mxu0 0
    %1301 = vmatprep.subr.bf16.mxu0 0
    %1302 = vmatpush1.bf16.xpose.msra.mxu0 0
    %1303 = vmatprep.subr.bf16.mxu0 0
    %1304 = vmatpush1.bf16.xpose.msra.mxu0 0
    %1305 = vmatprep.subr.bf16.mxu0 0
    %1306 = vmatpush1.bf16.xpose.msra.mxu0 0
    %1307 = vmatprep.subr.bf16.mxu0 0
    %1308 = vmatpush1.bf16.xpose.msra.mxu0 0
    %1309 = vmatprep.subr.bf16.mxu0 0
    %1310 = vmatpush1.bf16.xpose.msra.mxu0 0
    %1311 = vmatprep.subr.bf16.mxu0 0
    %1312 = vmatpush1.bf16.xpose.msra.mxu0 0
    %1313 = vmatprep.subr.bf16.mxu0 0
    %1314 = vmatpush1.bf16.xpose.msra.mxu0 0
    %1315 = vmatprep.subr.bf16.mxu0 0
    %1316 = vmatpush1.bf16.xpose.msra.mxu0 0
    %1317 = vmatprep.subr.bf16.mxu0 0
    %1318 = vmatpush1.bf16.xpose.msra.mxu0 0
    %1319 = vmatprep.subr.bf16.mxu0 0
    %1320 = vmatpush1.bf16.xpose.msra.mxu0 0
    %1321 = vmatprep.subr.bf16.mxu0 0
    %1322 = vmatpush1.bf16.xpose.msra.mxu0 0
    %1323 = vmatprep.subr.bf16.mxu0 0
    %1324 = vmatpush1.bf16.xpose.msra.mxu0 0
    %1325 = vmatprep.mubr.bf16.mxu0 0
    %1326 = vmatmul.mubr.bf16.gmra.mrb[0].mxu0 %v1288
    %v1327 = vpop.f32.mrb[0].mxu0
    %v1328 = vadd.f32 0.0, %v1327
    %v1329 = vpop.f32.mrb[0].mxu0
    %v1330 = vpop.f32.mrb[0].mxu0
    %v1331 = vpop.f32.mrb[0].mxu0
    %1332 = vdwg.mxu0
    %v1333 = vmul.f32 %v1278, 0.25
    %v1334 = vmul.f32 %v1328, 0.25
    %v1335 = vsel %vm271, %v1333, -inf
    %1336 = vmax.xlane.f32.xlu0 %v1335
    %v1337 = vpop.xlane.xlu0 %1336
    %v1338 = vsel %vm271, %v1334, -inf
    %1339 = vmax.xlane.f32.xlu0 %v1338
    %v1340 = vpop.xlane.xlu0 %1339
    %v1341 = vsub.f32 %v1333, %v1337
    %v1342 = vsub.f32 %v1334, %v1340
    %v1343 = vmul.f32 %v1341, 1.442695
    %v1344 = vpow.pop %v1343
    %v1345 = vmul.f32 %v1342, 1.442695
    %v1346 = vpow.pop %v1345
    %v1347 = vsel %vm271, %v1344, 0.0
    %1348 = vadd.xlane.f32.xlu0 %v1347
    %v1349 = vpop.xlane.xlu0 %1348
    %v1350 = vsel %vm271, %v1346, 0.0
    %1351 = vadd.xlane.f32.xlu0 %v1350
    %v1352 = vpop.xlane.xlu0 %1351
    %v1353 = vrcp.pop %v1349
    %v1354 = vrcp.pop %v1352
    %v1355 = vmul.f32 %v1344, %v1353
    %v1356 = vmul.f32 %v1346, %v1354
    %v1357 = vpack.c.bf16 %v1355, %v1355
    %v1358 = vpack.c.bf16 %v1356, %v1356
    %1359 = vrot.lane.b32.xlu0 %v1013, 48
    %v1360 = vpop.permute.xlu0 %1359
    %v1362 = vsel %vm271, %v1357, 0
    %v1365 = vsel %vm301, %v1360, 0
    %1367 = vmatprep.subr.bf16.mxu0 0
    %1368 = vmatpush1.bf16.msra.mxu0 %v1365
    %1369 = vmatprep.subr.bf16.mxu0 0
    %1370 = vmatpush1.bf16.msra.mxu0 0
    %1371 = vmatprep.subr.bf16.mxu0 0
    %1372 = vmatpush1.bf16.msra.mxu0 0
    %1373 = vmatprep.subr.bf16.mxu0 0
    %1374 = vmatpush1.bf16.msra.mxu0 0
    %1375 = vmatprep.subr.bf16.mxu0 0
    %1376 = vmatpush1.bf16.msra.mxu0 0
    %1377 = vmatprep.subr.bf16.mxu0 0
    %1378 = vmatpush1.bf16.msra.mxu0 0
    %1379 = vmatprep.subr.bf16.mxu0 0
    %1380 = vmatpush1.bf16.msra.mxu0 0
    %1381 = vmatprep.subr.bf16.mxu0 0
    %1382 = vmatpush1.bf16.msra.mxu0 0
    %1383 = vmatprep.subr.bf16.mxu0 0
    %1384 = vmatpush1.bf16.msra.mxu0 0
    %1385 = vmatprep.subr.bf16.mxu0 0
    %1386 = vmatpush1.bf16.msra.mxu0 0
    %1387 = vmatprep.subr.bf16.mxu0 0
    %1388 = vmatpush1.bf16.msra.mxu0 0
    %1389 = vmatprep.subr.bf16.mxu0 0
    %1390 = vmatpush1.bf16.msra.mxu0 0
    %1391 = vmatprep.subr.bf16.mxu0 0
    %1392 = vmatpush1.bf16.msra.mxu0 0
    %1393 = vmatprep.subr.bf16.mxu0 0
    %1394 = vmatpush1.bf16.msra.mxu0 0
    %1395 = vmatprep.subr.bf16.mxu0 0
    %1396 = vmatpush1.bf16.msra.mxu0 0
    %1397 = vmatprep.subr.bf16.mxu0 0
    %1398 = vmatpush1.bf16.msra.mxu0 0
    %1399 = vmatprep.mubr.bf16.mxu0 0
    %1400 = vmatmul.mubr.bf16.gmra.mrb[0].mxu0 %v1362
    %v1401 = vpop.f32.mrb[0].mxu0
    %v1402 = vadd.f32 0.0, %v1401
    %v1403 = vpop.f32.mrb[0].mxu0
    %v1404 = vpop.f32.mrb[0].mxu0
    %v1405 = vpop.f32.mrb[0].mxu0
    %1406 = vdwg.mxu0
    %1407 = vrot.lane.b32.xlu0 %v1014, 48
    %v1408 = vpop.permute.xlu0 %1407
    %v1410 = vsel %vm271, %v1358, 0
    %v1413 = vsel %vm301, %v1408, 0
    %1415 = vmatprep.subr.bf16.mxu0 0
    %1416 = vmatpush1.bf16.msra.mxu0 %v1413
    %1417 = vmatprep.subr.bf16.mxu0 0
    %1418 = vmatpush1.bf16.msra.mxu0 0
    %1419 = vmatprep.subr.bf16.mxu0 0
    %1420 = vmatpush1.bf16.msra.mxu0 0
    %1421 = vmatprep.subr.bf16.mxu0 0
    %1422 = vmatpush1.bf16.msra.mxu0 0
    %1423 = vmatprep.subr.bf16.mxu0 0
    %1424 = vmatpush1.bf16.msra.mxu0 0
    %1425 = vmatprep.subr.bf16.mxu0 0
    %1426 = vmatpush1.bf16.msra.mxu0 0
    %1427 = vmatprep.subr.bf16.mxu0 0
    %1428 = vmatpush1.bf16.msra.mxu0 0
    %1429 = vmatprep.subr.bf16.mxu0 0
    %1430 = vmatpush1.bf16.msra.mxu0 0
    %1431 = vmatprep.subr.bf16.mxu0 0
    %1432 = vmatpush1.bf16.msra.mxu0 0
    %1433 = vmatprep.subr.bf16.mxu0 0
    %1434 = vmatpush1.bf16.msra.mxu0 0
    %1435 = vmatprep.subr.bf16.mxu0 0
    %1436 = vmatpush1.bf16.msra.mxu0 0
    %1437 = vmatprep.subr.bf16.mxu0 0
    %1438 = vmatpush1.bf16.msra.mxu0 0
    %1439 = vmatprep.subr.bf16.mxu0 0
    %1440 = vmatpush1.bf16.msra.mxu0 0
    %1441 = vmatprep.subr.bf16.mxu0 0
    %1442 = vmatpush1.bf16.msra.mxu0 0
    %1443 = vmatprep.subr.bf16.mxu0 0
    %1444 = vmatpush1.bf16.msra.mxu0 0
    %1445 = vmatprep.subr.bf16.mxu0 0
    %1446 = vmatpush1.bf16.msra.mxu0 0
    %1447 = vmatprep.mubr.bf16.mxu0 0
    %1448 = vmatmul.mubr.bf16.gmra.mrb[0].mxu0 %v1410
    %v1449 = vpop.f32.mrb[0].mxu0
    %v1450 = vadd.f32 0.0, %v1449
    %v1451 = vpop.f32.mrb[0].mxu0
    %v1452 = vpop.f32.mrb[0].mxu0
    %v1453 = vpop.f32.mrb[0].mxu0
    %1454 = vdwg.mxu0
    %1457 = vrot.lane.b32.xlu0 %v1402, 16
    %v1458 = vpop.permute.xlu0 %1457
    %1459 = vrot.lane.b32.xlu0 %v1450, 16
    %v1460 = vpop.permute.xlu0 %1459
    %v1463 = vsel %vm174, %v1180, %v1458
    %v1464 = vsel %vm174, %v1228, %v1460
    %s1465 = scalar_lea.vmem %s2, 16
    %v1466 = vld [vmem:[%s1465] sm:$0xf]
    %v1467 = vld [vmem:[%s1465 + $0x4] sm:$0xf]
    %v1468 = vld [vmem:[%s1465 + $0x8] sm:$0xf]
    %v1469 = vld [vmem:[%s1465 + $0xc] sm:$0xf]
    %v1470 = vpack.c.bf16 %v1464, %v1463
    %v1471 = vld [vmem:[#allocation5 + $0xb] sm:$0x1]
    %v1472 = vlaneseq
    %v1473 = vshrl.u32 %v1472, 7
    %v1474 = vsub.s32 0, %v1473
    %v1475 = vrot.slane %v1471, %v1474
    %v1480 = vunpack.c.l.b16 %v1466
    %v1481 = vunpack.c.l.b16 %v1467
    %v1482 = vunpack.c.l.b16 %v1468
    %v1483 = vunpack.c.l.b16 %v1469
    %v1484 = vpack.c.b16 %v1481, %v1480
    %v1485 = vpack.c.b16 %v1483, %v1482
    %v1489 = vsel %vm60, %v1470, 0
    %1491 = vmatprep.subr.bf16.mxu0 0
    %1492 = vmatpush1.bf16.msra.mxu0 %v1484
    %1493 = vmatprep.subr.bf16.mxu0 0
    %1494 = vmatpush1.bf16.msra.mxu0 %v1485
    %1495 = vmatprep.subr.bf16.mxu0 0
    %1496 = vmatpush1.bf16.msra.mxu0 0
    %1497 = vmatprep.subr.bf16.mxu0 0
    %1498 = vmatpush1.bf16.msra.mxu0 0
    %1499 = vmatprep.subr.bf16.mxu0 0
    %1500 = vmatpush1.bf16.msra.mxu0 0
    %1501 = vmatprep.subr.bf16.mxu0 0
    %1502 = vmatpush1.bf16.msra.mxu0 0
    %1503 = vmatprep.subr.bf16.mxu0 0
    %1504 = vmatpush1.bf16.msra.mxu0 0
    %1505 = vmatprep.subr.bf16.mxu0 0
    %1506 = vmatpush1.bf16.msra.mxu0 0
    %1507 = vmatprep.subr.bf16.mxu0 0
    %1508 = vmatpush1.bf16.msra.mxu0 0
    %1509 = vmatprep.subr.bf16.mxu0 0
    %1510 = vmatpush1.bf16.msra.mxu0 0
    %1511 = vmatprep.subr.bf16.mxu0 0
    %1512 = vmatpush1.bf16.msra.mxu0 0
    %1513 = vmatprep.subr.bf16.mxu0 0
    %1514 = vmatpush1.bf16.msra.mxu0 0
    %1515 = vmatprep.subr.bf16.mxu0 0
    %1516 = vmatpush1.bf16.msra.mxu0 0
    %1517 = vmatprep.subr.bf16.mxu0 0
    %1518 = vmatpush1.bf16.msra.mxu0 0
    %1519 = vmatprep.subr.bf16.mxu0 0
    %1520 = vmatpush1.bf16.msra.mxu0 0
    %1521 = vmatprep.subr.bf16.mxu0 0
    %1522 = vmatpush1.bf16.msra.mxu0 0
    %1523 = vmatprep.mubr.bf16.mxu0 0
    %1524 = vmatmul.mubr.bf16.gmra.mrb[0].mxu0 %v1489
    %v1525 = vpop.f32.mrb[0].mxu0
    %v1526 = vadd.f32 %v1475, %v1525
    %v1527 = vpop.f32.mrb[0].mxu0
    %v1528 = vpop.f32.mrb[0].mxu0
    %v1529 = vadd.f32 %v1475, %v1528
    %v1530 = vpop.f32.mrb[0].mxu0
    %1531 = vdwg.mxu0
    %v1532 = vadd.f32 %v1526, %v940
    %v1533 = vadd.f32 %v1529, %v941
    %v1534 = vld [vmem:[#allocation5 + $0xc] sm:$0x1]
    %v1535 = vld [vmem:[#allocation5 + $0xd] sm:$0x1]
    %v1536 = vsel %vm60, %v1532, 0.0
    %1537 = vadd.xlane.f32.xlu0 %v1536
    %v1538 = vpop.xlane.xlu0 %1537
    %v1539 = vsel %vm60, %v1533, 0.0
    %1540 = vadd.xlane.f32.xlu0 %v1539
    %v1541 = vpop.xlane.xlu0 %1540
    %v1542 = vmul.f32 %v1538, %v67
    %v1543 = vmul.f32 %v1541, %v67
    %v1544 = vsub.f32 %v1532, %v1542
    %v1545 = vsub.f32 %v1533, %v1543
    %v1546 = vmul.f32 %v1544, %v1544
    %v1547 = vmul.f32 %v1545, %v1545
    %v1548 = vsel %vm60, %v1546, 0.0
    %1549 = vadd.xlane.f32.xlu0 %v1548
    %v1550 = vpop.xlane.xlu0 %1549
    %v1551 = vsel %vm60, %v1547, 0.0
    %1552 = vadd.xlane.f32.xlu0 %v1551
    %v1553 = vpop.xlane.xlu0 %1552
    %v1554 = vmul.f32 %v1550, %v67
    %v1555 = vmul.f32 %v1553, %v67
    %v1556 = vadd.f32 %v1554, 1e-12
    %v1557 = vadd.f32 %v1555, 1e-12
    %v1558 = vrsqrt.pop %v1556
    %v1559 = vrsqrt.pop %v1557
    %v1560 = vmul.f32 %v1544, %v1558
    %v1561 = vmul.f32 %v1545, %v1559
    %v1562 = vlaneseq
    %v1563 = vshrl.u32 %v1562, 7
    %v1564 = vsub.s32 0, %v1563
    %v1565 = vrot.slane %v1534, %v1564
    %v1566 = vmul.f32 %v1560, %v1565
    %v1567 = vmul.f32 %v1561, %v1565
    %v1568 = vlaneseq
    %v1569 = vshrl.u32 %v1568, 7
    %v1570 = vsub.s32 0, %v1569
    %v1571 = vrot.slane %v1535, %v1570
    %v1572 = vadd.f32 %v1566, %v1571
    %v1573 = vadd.f32 %v1567, %v1571
    %s1574 = scalar_lea.vmem %s3, 16
    %v1575 = vld [vmem:[%s1574] sm:$0xf]
    %v1576 = vld [vmem:[%s1574 + $0x4] sm:$0xf]
    %v1577 = vld [vmem:[%s1574 + $0x8] sm:$0xf]
    %v1578 = vld [vmem:[%s1574 + $0xc] sm:$0xf]
    %v1579 = vpack.c.bf16 %v1573, %v1572
    %v1580 = vld [vmem:[#allocation5 + $0xe] sm:$0x1]
    %v1581 = vlaneseq
    %v1582 = vshrl.u32 %v1581, 7
    %v1583 = vsub.s32 0, %v1582
    %v1584 = vrot.slane %v1580, %v1583
    %v1589 = vunpack.c.l.b16 %v1575
    %v1590 = vunpack.c.l.b16 %v1576
    %v1591 = vunpack.c.l.b16 %v1577
    %v1592 = vunpack.c.l.b16 %v1578
    %v1593 = vpack.c.b16 %v1590, %v1589
    %v1594 = vpack.c.b16 %v1592, %v1591
    %v1598 = vsel %vm60, %v1579, 0
    %1600 = vmatprep.subr.bf16.mxu0 0
    %1601 = vmatpush1.bf16.msra.mxu0 %v1593
    %1602 = vmatprep.subr.bf16.mxu0 0
    %1603 = vmatpush1.bf16.msra.mxu0 %v1594
    %1604 = vmatprep.subr.bf16.mxu0 0
    %1605 = vmatpush1.bf16.msra.mxu0 0
    %1606 = vmatprep.subr.bf16.mxu0 0
    %1607 = vmatpush1.bf16.msra.mxu0 0
    %1608 = vmatprep.subr.bf16.mxu0 0
    %1609 = vmatpush1.bf16.msra.mxu0 0
    %1610 = vmatprep.subr.bf16.mxu0 0
    %1611 = vmatpush1.bf16.msra.mxu0 0
    %1612 = vmatprep.subr.bf16.mxu0 0
    %1613 = vmatpush1.bf16.msra.mxu0 0
    %1614 = vmatprep.subr.bf16.mxu0 0
    %1615 = vmatpush1.bf16.msra.mxu0 0
    %1616 = vmatprep.subr.bf16.mxu0 0
    %1617 = vmatpush1.bf16.msra.mxu0 0
    %1618 = vmatprep.subr.bf16.mxu0 0
    %1619 = vmatpush1.bf16.msra.mxu0 0
    %1620 = vmatprep.subr.bf16.mxu0 0
    %1621 = vmatpush1.bf16.msra.mxu0 0
    %1622 = vmatprep.subr.bf16.mxu0 0
    %1623 = vmatpush1.bf16.msra.mxu0 0
    %1624 = vmatprep.subr.bf16.mxu0 0
    %1625 = vmatpush1.bf16.msra.mxu0 0
    %1626 = vmatprep.subr.bf16.mxu0 0
    %1627 = vmatpush1.bf16.msra.mxu0 0
    %1628 = vmatprep.subr.bf16.mxu0 0
    %1629 = vmatpush1.bf16.msra.mxu0 0
    %1630 = vmatprep.subr.bf16.mxu0 0
    %1631 = vmatpush1.bf16.msra.mxu0 0
    %1632 = vmatprep.mubr.bf16.mxu0 0
    %1633 = vmatmul.mubr.bf16.gmra.mrb[0].mxu0 %v1598
    %v1634 = vpop.f32.mrb[0].mxu0
    %v1635 = vadd.f32 %v1584, %v1634
    %v1636 = vpop.f32.mrb[0].mxu0
    %v1637 = vpop.f32.mrb[0].mxu0
    %v1638 = vadd.f32 %v1584, %v1637
    %v1639 = vpop.f32.mrb[0].mxu0
    %1640 = vdwg.mxu0
    %v1641 = vmul.f32 %v1635, 0.5
    %v1642 = vmul.f32 %v1638, 0.5
    %v1643 = vmul.f32 %v1635, 0.044715
    %v1644 = vmul.f32 %v1638, 0.044715
    %v1645 = vmul.f32 %v1643, %v1635
    %v1646 = vmul.f32 %v1644, %v1638
    %v1647 = vmul.f32 %v1645, %v1635
    %v1648 = vmul.f32 %v1646, %v1638
    %v1649 = vadd.f32 %v1635, %v1647
    %v1650 = vadd.f32 %v1638, %v1648
    %v1651 = vmul.f32 %v1649, 0.7978846
    %v1652 = vmul.f32 %v1650, 0.7978846
    %v1653 = vtanh.pop %v1651
    %v1654 = vtanh.pop %v1652
    %v1655 = vadd.f32 %v1653, 1.0
    %v1656 = vadd.f32 %v1654, 1.0
    %v1657 = vmul.f32 %v1641, %v1655
    %v1658 = vmul.f32 %v1642, %v1656
    %s1659 = scalar_lea.vmem %s4, 32
    %v1660 = vld [vmem:[%s1659] sm:$0xf]
    %v1661 = vld [vmem:[%s1659 + $0x4] sm:$0xf]
    %v1662 = vld [vmem:[%s1659 + $0x8] sm:$0xf]
    %v1663 = vld [vmem:[%s1659 + $0xc] sm:$0xf]
    %v1664 = vld [vmem:[%s1659 + $0x10] sm:$0xf]
    %v1665 = vld [vmem:[%s1659 + $0x14] sm:$0xf]
    %v1666 = vld [vmem:[%s1659 + $0x18] sm:$0xf]
    %v1667 = vld [vmem:[%s1659 + $0x1c] sm:$0xf]
    %v1668 = vpack.c.bf16 %v1658, %v1657
    %v1669 = vld [vmem:[#allocation5 + $0xf] sm:$0x1]
    %v1670 = vlaneseq
    %v1671 = vshrl.u32 %v1670, 7
    %v1672 = vsub.s32 0, %v1671
    %v1673 = vrot.slane %v1669, %v1672
    %v1682 = vunpack.c.l.b16 %v1660
    %v1683 = vunpack.c.l.b16 %v1661
    %v1684 = vunpack.c.l.b16 %v1662
    %v1685 = vunpack.c.l.b16 %v1663
    %v1686 = vunpack.c.l.b16 %v1664
    %v1687 = vunpack.c.l.b16 %v1665
    %v1688 = vunpack.c.l.b16 %v1666
    %v1689 = vunpack.c.l.b16 %v1667
    %v1690 = vpack.c.b16 %v1683, %v1682
    %v1691 = vpack.c.b16 %v1685, %v1684
    %v1692 = vpack.c.b16 %v1687, %v1686
    %v1693 = vpack.c.b16 %v1689, %v1688
    %v1699 = vsel %vm855, %v1668, 0
    %1701 = vmatprep.subr.bf16.mxu0 0
    %1702 = vmatpush1.bf16.msra.mxu0 %v1690
    %1703 = vmatprep.subr.bf16.mxu0 0
    %1704 = vmatpush1.bf16.msra.mxu0 %v1691
    %1705 = vmatprep.subr.bf16.mxu0 0
    %1706 = vmatpush1.bf16.msra.mxu0 %v1692
    %1707 = vmatprep.subr.bf16.mxu0 0
    %1708 = vmatpush1.bf16.msra.mxu0 %v1693
    %1709 = vmatprep.subr.bf16.mxu0 0
    %1710 = vmatpush1.bf16.msra.mxu0 0
    %1711 = vmatprep.subr.bf16.mxu0 0
    %1712 = vmatpush1.bf16.msra.mxu0 0
    %1713 = vmatprep.subr.bf16.mxu0 0
    %1714 = vmatpush1.bf16.msra.mxu0 0
    %1715 = vmatprep.subr.bf16.mxu0 0
    %1716 = vmatpush1.bf16.msra.mxu0 0
    %1717 = vmatprep.subr.bf16.mxu0 0
    %1718 = vmatpush1.bf16.msra.mxu0 0
    %1719 = vmatprep.subr.bf16.mxu0 0
    %1720 = vmatpush1.bf16.msra.mxu0 0
    %1721 = vmatprep.subr.bf16.mxu0 0
    %1722 = vmatpush1.bf16.msra.mxu0 0
    %1723 = vmatprep.subr.bf16.mxu0 0
    %1724 = vmatpush1.bf16.msra.mxu0 0
    %1725 = vmatprep.subr.bf16.mxu0 0
    %1726 = vmatpush1.bf16.msra.mxu0 0
    %1727 = vmatprep.subr.bf16.mxu0 0
    %1728 = vmatpush1.bf16.msra.mxu0 0
    %1729 = vmatprep.subr.bf16.mxu0 0
    %1730 = vmatpush1.bf16.msra.mxu0 0
    %1731 = vmatprep.subr.bf16.mxu0 0
    %1732 = vmatpush1.bf16.msra.mxu0 0
    %1733 = vmatprep.mubr.bf16.mxu0 0
    %1734 = vmatmul.mubr.bf16.gmra.mrb[0].mxu0 %v1699
    %v1735 = vpop.f32.mrb[0].mxu0
    %v1736 = vadd.f32 %v1673, %v1735
    %v1737 = vpop.f32.mrb[0].mxu0
    %v1738 = vpop.f32.mrb[0].mxu0
    %v1739 = vadd.f32 %v1673, %v1738
    %v1740 = vpop.f32.mrb[0].mxu0
    %1741 = vdwg.mxu0
    %v1742 = vadd.f32 %v1736, %v1572
    %v1743 = vadd.f32 %v1739, %v1573
    %v1744 = vld [vmem:[#allocation5 + $0x10] sm:$0x1]
    %v1745 = vld [vmem:[#allocation5 + $0x11] sm:$0x1]
    %v1746 = vsel %vm60, %v1742, 0.0
    %1747 = vadd.xlane.f32.xlu0 %v1746
    %v1748 = vpop.xlane.xlu0 %1747
    %v1749 = vsel %vm60, %v1743, 0.0
    %1750 = vadd.xlane.f32.xlu0 %v1749
    %v1751 = vpop.xlane.xlu0 %1750
    %v1752 = vmul.f32 %v1748, %v67
    %v1753 = vmul.f32 %v1751, %v67
    %v1754 = vsub.f32 %v1742, %v1752
    %v1755 = vsub.f32 %v1743, %v1753
    %v1756 = vmul.f32 %v1754, %v1754
    %v1757 = vmul.f32 %v1755, %v1755
    %v1758 = vsel %vm60, %v1756, 0.0
    %1759 = vadd.xlane.f32.xlu0 %v1758
    %v1760 = vpop.xlane.xlu0 %1759
    %v1761 = vsel %vm60, %v1757, 0.0
    %1762 = vadd.xlane.f32.xlu0 %v1761
    %v1763 = vpop.xlane.xlu0 %1762
    %v1764 = vmul.f32 %v1760, %v67
    %v1765 = vmul.f32 %v1763, %v67
    %v1766 = vadd.f32 %v1764, 1e-12
    %v1767 = vadd.f32 %v1765, 1e-12
    %v1768 = vrsqrt.pop %v1766
    %v1769 = vrsqrt.pop %v1767
    %v1770 = vmul.f32 %v1754, %v1768
    %v1771 = vmul.f32 %v1755, %v1769
    %v1772 = vlaneseq
    %v1773 = vshrl.u32 %v1772, 7
    %v1774 = vsub.s32 0, %v1773
    %v1775 = vrot.slane %v1744, %v1774
    %v1776 = vmul.f32 %v1770, %v1775
    %v1777 = vmul.f32 %v1771, %v1775
    %v1778 = vlaneseq
    %v1779 = vshrl.u32 %v1778, 7
    %v1780 = vsub.s32 0, %v1779
    %v1781 = vrot.slane %v1745, %v1780
    %v1782 = vadd.f32 %v1776, %v1781
    %v1783 = vadd.f32 %v1777, %v1781
    %v1784 = vld [vmem:[%s5] sm:$0xf]
    %v1785 = vld [vmem:[%s5 + $0x4] sm:$0xf]
    %v1786 = vld [vmem:[%s5 + $0x8] sm:$0xf]
    %v1787 = vld [vmem:[%s5 + $0xc] sm:$0xf]
    %v1788 = vpack.c.bf16 %v1783, %v1782
    %v1789 = vld [vmem:[#allocation5 + $0x12] sm:$0x1]
    %v1790 = vlaneseq
    %v1791 = vshrl.u32 %v1790, 7
    %v1792 = vsub.s32 0, %v1791
    %v1793 = vrot.slane %v1789, %v1792
    %v1798 = vunpack.c.l.b16 %v1784
    %v1799 = vunpack.c.l.b16 %v1785
    %v1800 = vunpack.c.l.b16 %v1786
    %v1801 = vunpack.c.l.b16 %v1787
    %v1802 = vpack.c.b16 %v1799, %v1798
    %v1803 = vpack.c.b16 %v1801, %v1800
    %v1807 = vsel %vm60, %v1788, 0
    %1809 = vmatprep.subr.bf16.mxu0 0
    %1810 = vmatpush1.bf16.msra.mxu0 %v1802
    %1811 = vmatprep.subr.bf16.mxu0 0
    %1812 = vmatpush1.bf16.msra.mxu0 %v1803
    %1813 = vmatprep.subr.bf16.mxu0 0
    %1814 = vmatpush1.bf16.msra.mxu0 0
    %1815 = vmatprep.subr.bf16.mxu0 0
    %1816 = vmatpush1.bf16.msra.mxu0 0
    %1817 = vmatprep.subr.bf16.mxu0 0
    %1818 = vmatpush1.bf16.msra.mxu0 0
    %1819 = vmatprep.subr.bf16.mxu0 0
    %1820 = vmatpush1.bf16.msra.mxu0 0
    %1821 = vmatprep.subr.bf16.mxu0 0
    %1822 = vmatpush1.bf16.msra.mxu0 0
    %1823 = vmatprep.subr.bf16.mxu0 0
    %1824 = vmatpush1.bf16.msra.mxu0 0
    %1825 = vmatprep.subr.bf16.mxu0 0
    %1826 = vmatpush1.bf16.msra.mxu0 0
    %1827 = vmatprep.subr.bf16.mxu0 0
    %1828 = vmatpush1.bf16.msra.mxu0 0
    %1829 = vmatprep.subr.bf16.mxu0 0
    %1830 = vmatpush1.bf16.msra.mxu0 0
    %1831 = vmatprep.subr.bf16.mxu0 0
    %1832 = vmatpush1.bf16.msra.mxu0 0
    %1833 = vmatprep.subr.bf16.mxu0 0
    %1834 = vmatpush1.bf16.msra.mxu0 0
    %1835 = vmatprep.subr.bf16.mxu0 0
    %1836 = vmatpush1.bf16.msra.mxu0 0
    %1837 = vmatprep.subr.bf16.mxu0 0
    %1838 = vmatpush1.bf16.msra.mxu0 0
    %1839 = vmatprep.subr.bf16.mxu0 0
    %1840 = vmatpush1.bf16.msra.mxu0 0
    %1841 = vmatprep.mubr.bf16.mxu0 0
    %1842 = vmatmul.mubr.bf16.gmra.mrb[0].mxu0 %v1807
    %v1843 = vpop.f32.mrb[0].mxu0
    %v1844 = vadd.f32 %v1793, %v1843
    %v1845 = vpop.f32.mrb[0].mxu0
    %v1846 = vpop.f32.mrb[0].mxu0
    %v1847 = vadd.f32 %v1793, %v1846
    %v1848 = vpop.f32.mrb[0].mxu0
    %1849 = vdwg.mxu0
    %1850 = vmax.xlane.f32.xlu0 %v1844
    %v1851 = vpop.xlane.xlu0 %1850
    %1852 = vmax.xlane.f32.xlu0 %v1847
    %v1853 = vpop.xlane.xlu0 %1852
    %v1854 = vsub.f32 %v1844, %v1851
    %v1855 = vsub.f32 %v1847, %v1853
    %v1856 = vmul.f32 %v1854, 1.442695
    %v1857 = vpow.pop %v1856
    %v1858 = vmul.f32 %v1855, 1.442695
    %v1859 = vpow.pop %v1858
    %1860 = vadd.xlane.f32.xlu0 %v1857
    %v1861 = vpop.xlane.xlu0 %1860
    %1862 = vadd.xlane.f32.xlu0 %v1859
    %v1863 = vpop.xlane.xlu0 %1862
    %v1864 = vlog2.pop %v1861
    %v1865 = vmul.f32 %v1864, 0.6931472
    %v1866 = vlog2.pop %v1863
    %v1867 = vmul.f32 %v1866, 0.6931472
    %v1868 = vsub.f32 %v1854, %v1865
    %v1869 = vsub.f32 %v1855, %v1867
    %v1870 = vmul.f32 %v1868, 1.442695
    %v1871 = vpow.pop %v1870
    %v1872 = vmul.f32 %v1869, 1.442695
    %v1873 = vpow.pop %v1872
    %1874 = vst [vmem:[#allocation7] sm:$0xff] %v1871
    %1875 = vst [vmem:[#allocation7 + $0x8] sm:$0xff] %v1873
    // Predicated region
    $region38: #{tpu_custom_call.1} parent=1 // pred_check
      _
    $region39: #{tpu_custom_call.1} parent=1 // pred_check_branch
      %1877 = sbr.rel (0) target = $region41
    $region40: #{tpu_custom_call.1} parent=1 // pred_region
      %s1879 = ssub.s32 256, 256
      %1880 = vsyncadd [#allocation4], %s1879
      %s1881 = sshll.u32 [#allocation7], 4
      %s1882 = int_to_ptr.vmem [resolvable:$true] %s1881
      %1887 = dma.vmem_to_hbm [thread:$0]  %s1882, 256, %s7, [#allocation4], 128, 128, 8
    $region41: #{tpu_custom_call.1} parent=1 // pred_fallthru
      _
    // Predicated region
    $region42: #{tpu_custom_call.1} parent=1 // pred_check
      _
    $region43: #{tpu_custom_call.1} parent=1 // pred_check_branch
      %1889 = sbr.rel (0) target = $region45
    $region44: #{tpu_custom_call.1} parent=1 // pred_region
      %1890 = dma.done [#allocation4], 256
    $region45: #{tpu_custom_call.1} parent=1 // pred_fallthru
      _
    %1891 = vsyncpa [#allocation3], 1
    %1892 = vsyncpa [#allocation6], 1
    %1893 = vsyncpa [#allocation4], 1

</llo_original>
